<compile_context>
chip_gen: v7x
topology: tpu7x:2x2x1
jax: 0.10.0
libtpu: 0.0.40
codegen_flags: <defaults>
</compile_context>

<pallas_src>
import functools

import jax
import jax.numpy as jnp
from jax.experimental import pallas as pl
from jax.experimental.pallas import tpu as pltpu


# MXU operand dtype.  bf16 (with f32 accumulation) is the right default once
# H grows; f32 kept here to preserve the 1e-3 parity check at H=32.
MXU_DTYPE = jnp.float32


def _round_up(x, m):
    return (x + m - 1) // m * m


def _gate_transpose(w):
    """PyTorch (4H, in_dim) -> (in_dim, 4H), packed i|f|g|o gate order kept."""
    return jnp.asarray(w, jnp.float32).T


# ----------------------------------------------------------------------------
# Forward pass (matches LSTMModel.forward: logits = fc(dropout(h_n[-1])))
# ----------------------------------------------------------------------------
@functools.partial(jax.jit, static_argnames=("num_layers",))
def lstm_model_forward(x_bti, params, num_layers):
    """x_bti: (B, T, input_size), batch_first like the PyTorch module."""
    x_bti = x_bti.astype(jnp.float32)
    B, T, I = x_bti.shape
    H = params["lstm"][0]["w_hh"].shape[1]
    C = params["fc_w"].shape[0]
    G = 4 * H                      # packed gate width (128 lanes for H=32)
    L = num_layers

    Bp = _round_up(B, 8)           # f32 sublane alignment
    Cp = _round_up(C, 128)         # lane-dense logits store

    # ---- hoisted layer-0 input projection: one big XLA matmul, time-major ----
    p0 = params["lstm"][0]
    w_ih0 = _gate_transpose(p0["w_ih"])                            # (I, 4H)
    b0 = (p0["b_ih"] + p0["b_hh"]).astype(jnp.float32)             # (4H,)
    x_pad = jnp.pad(x_bti, ((0, Bp - B), (0, 0), (0, 0)))          # (Bp, T, I)
    gx0 = jnp.einsum("bti,ig->tbg", x_pad, w_ih0) + b0             # (T, Bp, 4H)

    # ---- recurrent weights (all layers) + inter-layer input weights (l>=1) ----
    whh_stack = jnp.stack(
        [_gate_transpose(params["lstm"][l]["w_hh"]) for l in range(L)]
    ).astype(MXU_DTYPE)                                            # (L, H, 4H)
    if L > 1:
        wih_next = jnp.stack(
            [_gate_transpose(params["lstm"][l]["w_ih"]) for l in range(1, L)]
        ).astype(MXU_DTYPE)                                        # (L-1, H, 4H)
        b_next = jnp.stack(
            [(params["lstm"][l]["b_ih"] + params["lstm"][l]["b_hh"]).astype(
                jnp.float32) for l in range(1, L)]
        )[:, None, :]                                              # (L-1, 1, 4H)
    else:
        wih_next = jnp.zeros((1, H, G), MXU_DTYPE)
        b_next = jnp.zeros((1, 1, G), jnp.float32)

    # ---- fc head, zero-padded to lane-dense (H, Cp) / (1, Cp) ----
    wfc = (jnp.zeros((H, Cp), jnp.float32)
           .at[:, :C].set(jnp.asarray(params["fc_w"], jnp.float32).T)
           .astype(MXU_DTYPE))
    bfc = jnp.zeros((1, Cp), jnp.float32).at[0, :C].set(
        jnp.asarray(params["fc_b"], jnp.float32))

    # ------------------------------------------------------------------ kernel
    def kernel(gx0_ref, whh_ref, wih_next_ref, b_next_ref, wfc_ref, bfc_ref,
               out_ref, gx_sc):
        # Gate-type lane mask, hoisted once (JAX does not CSE broadcasts).
        lane = jax.lax.broadcasted_iota(jnp.int32, (Bp, G), 1)
        is_g_gate = jnp.logical_and(lane >= 2 * H, lane < 3 * H)

        h = jnp.zeros((Bp, H), jnp.float32)
        for l in range(L):                        # L, T static -> fully unrolled
            h = jnp.zeros((Bp, H), jnp.float32)
            c = jnp.zeros((Bp, H), jnp.float32)
            whh = whh_ref[l]                      # (H, 4H), VMEM-resident
            if l + 1 < L:
                w_up = wih_next_ref[l]            # feeds layer l+1
                b_up = b_next_ref[l]
            for t in range(T):
                # Layer 0 reads the hoisted projection directly; deeper layers
                # read what the previous layer wrote into VMEM scratch.
                gx = gx0_ref[t] if l == 0 else gx_sc[t]
                gates = gx + jnp.dot(h.astype(MXU_DTYPE), whh,
                                     preferred_element_type=jnp.float32)
                # One sigmoid + one tanh over the packed 4H-wide block, then a
                # lane-select: half the EUP passes of per-gate activations.
                act = jnp.where(is_g_gate, jnp.tanh(gates),
                                jax.nn.sigmoid(gates))
                i_g = act[:, 0 * H:1 * H]
                f_g = act[:, 1 * H:2 * H]
                g_g = act[:, 2 * H:3 * H]
                o_g = act[:, 3 * H:4 * H]
                c = f_g * c + i_g * g_g
                h = o_g * jnp.tanh(c)
                if l + 1 < L:
                    # Interleave the next layer's input projection with this
                    # layer's recurrence (MXU has slack; no hseq buffer, no
                    # layer-boundary projection bubble).
                    gx_sc[t] = (jnp.dot(h.astype(MXU_DTYPE), w_up,
                                        preferred_element_type=jnp.float32)
                                + b_up)

        # fc head on the final hidden state.  nn.Dropout is identity at eval.
        # TODO(synk): training-mode dropout (PRNG mask + 1/(1-p)) not implemented.
        out_ref[...] = (jnp.dot(h.astype(MXU_DTYPE), wfc_ref[...],
                                preferred_element_type=jnp.float32)
                        + bfc_ref[...]).astype(out_ref.dtype)

    out_pad = pl.pallas_call(
        kernel,
        out_shape=jax.ShapeDtypeStruct((Bp, Cp), jnp.float32),
        # No grid: every operand is tiny and whole-array VMEM-resident for the
        # single invocation; the recurrence is an in-kernel unrolled loop.
        scratch_shapes=[
            pltpu.VMEM((T, Bp, G), jnp.float32),   # next layer's input gates
        ],
    )(gx0, whh_stack, wih_next, b_next, wfc, bfc)

    return out_pad[:B, :C]


# ----------------------------------------------------------------------------
# Pure-JAX reference (sanity check)
# ----------------------------------------------------------------------------
def lstm_model_reference(x_bti, params, num_layers):
    x = x_bti.astype(jnp.float32)
    B = x.shape[0]
    seq = jnp.transpose(x, (1, 0, 2))    # (T, B, I)
    for layer in range(num_layers):
        p = params["lstm"][layer]
        H = p["w_hh"].shape[1]

        def step(carry, x_t, p=p, H=H):
            h, c = carry
            gates = x_t @ p["w_ih"].T + h @ p["w_hh"].T + p["b_ih"] + p["b_hh"]
            i = jax.nn.sigmoid(gates[:, 0 * H:1 * H])
            f = jax.nn.sigmoid(gates[:, 1 * H:2 * H])
            g = jnp.tanh(gates[:, 2 * H:3 * H])
            o = jax.nn.sigmoid(gates[:, 3 * H:4 * H])
            c = f * c + i * g
            h = o * jnp.tanh(c)
            return (h, c), h

        init = (jnp.zeros((B, H), jnp.float32), jnp.zeros((B, H), jnp.float32))
        (_, _), seq = jax.lax.scan(step, init, seq)
    h_last = seq[-1]
    return h_last @ params["fc_w"].T + params["fc_b"]


# ----------------------------------------------------------------------------
# Deterministic parameter init (PyTorch-like uniform(-1/sqrt(H), 1/sqrt(H)))
# ----------------------------------------------------------------------------
def init_params(key, input_size, hidden_size, num_layers, num_classes):
    bound = 1.0 / jnp.sqrt(hidden_size)
    params = {"lstm": []}
    for layer in range(num_layers):
        in_sz = input_size if layer == 0 else hidden_size
        key, k1, k2, k3, k4 = jax.random.split(key, 5)
        params["lstm"].append({
            "w_ih": jax.random.uniform(k1, (4 * hidden_size, in_sz),
                                       jnp.float32, -bound, bound),
            "w_hh": jax.random.uniform(k2, (4 * hidden_size, hidden_size),
                                       jnp.float32, -bound, bound),
            "b_ih": jax.random.uniform(k3, (4 * hidden_size,),
                                       jnp.float32, -bound, bound),
            "b_hh": jax.random.uniform(k4, (4 * hidden_size,),
                                       jnp.float32, -bound, bound),
        })
    key, k5, k6 = jax.random.split(key, 3)
    params["fc_w"] = jax.random.uniform(k5, (num_classes, hidden_size),
                                        jnp.float32, -bound, bound)
    params["fc_b"] = jax.random.uniform(k6, (num_classes,),
                                        jnp.float32, -bound, bound)
    return params


if __name__ == "__main__":
    INPUT_SIZE = 16
    HIDDEN_SIZE = 32
    NUM_LAYERS = 2
    NUM_CLASSES = 2
    BATCH = 4
    SEQ_LEN = 8

    key = jax.random.PRNGKey(0)
    key, xkey, pkey = jax.random.split(key, 3)
    x = jax.random.normal(xkey, (BATCH, SEQ_LEN, INPUT_SIZE), jnp.float32)
    params = init_params(pkey, INPUT_SIZE, HIDDEN_SIZE, NUM_LAYERS, NUM_CLASSES)

    out = lstm_model_forward(x, params, NUM_LAYERS)
    out = jax.block_until_ready(out)

    ref = lstm_model_reference(x, params, NUM_LAYERS)
    assert out.shape == (BATCH, NUM_CLASSES), out.shape
    assert jnp.allclose(out, ref, atol=1e-3, rtol=1e-3), (out, ref)

    print("KERNEL_OK")
</pallas_src>

<mosaic_0001>
module attributes {stable_mosaic.version = 11 : i64} {
  func.func @kernel(%arg0: memref<8x8x128xf32, #tpu.memory_space<vmem>>, %arg1: memref<2x32x128xf32, #tpu.memory_space<vmem>>, %arg2: memref<1x32x128xf32, #tpu.memory_space<vmem>>, %arg3: memref<1x1x128xf32, #tpu.memory_space<vmem>>, %arg4: memref<32x128xf32, #tpu.memory_space<vmem>>, %arg5: memref<1x128xf32, #tpu.memory_space<vmem>>, %arg6: memref<8x128xf32, #tpu.memory_space<vmem>>, %arg7: memref<8x8x128xf32, #tpu.memory_space<vmem>>) attributes {dimension_semantics = [], scalar_prefetch = 0 : i64, scratch_operands = 1 : i64, tpu.core_type = #tpu.core_type<tc>} {
    %0 = tpu.iota {dimensions = array<i32: 1>} : vector<8x128xi32>
    %c64_i32 = arith.constant 64 : i32
    %1 = vector.broadcast %c64_i32 : i32 to vector<8x128xi32>
    %2 = arith.cmpi sge, %0, %1 : vector<8x128xi32>
    %c96_i32 = arith.constant 96 : i32
    %3 = vector.broadcast %c96_i32 : i32 to vector<8x128xi32>
    %4 = arith.cmpi slt, %0, %3 : vector<8x128xi32>
    %5 = arith.andi %2, %4 : vector<8x128xi1>
    %cst = arith.constant 0.000000e+00 : f32
    %6 = vector.broadcast %cst : f32 to vector<8x32xf32>
    %cst_0 = arith.constant 0.000000e+00 : f32
    %7 = vector.broadcast %cst_0 : f32 to vector<8x32xf32>
    %c0 = arith.constant 0 : index
    %c0_1 = arith.constant 0 : index
    %c0_2 = arith.constant 0 : index
    %8 = vector.load %arg1[%c0, %c0_1, %c0_2] : memref<2x32x128xf32, #tpu.memory_space<vmem>>, vector<1x32x128xf32>
    %9 = vector.shape_cast %8 : vector<1x32x128xf32> to vector<32x128xf32>
    %c0_3 = arith.constant 0 : index
    %c0_4 = arith.constant 0 : index
    %c0_5 = arith.constant 0 : index
    %10 = vector.load %arg2[%c0_3, %c0_4, %c0_5] : memref<1x32x128xf32, #tpu.memory_space<vmem>>, vector<1x32x128xf32>
    %11 = vector.shape_cast %10 : vector<1x32x128xf32> to vector<32x128xf32>
    %c0_6 = arith.constant 0 : index
    %c0_7 = arith.constant 0 : index
    %c0_8 = arith.constant 0 : index
    %12 = vector.load %arg3[%c0_6, %c0_7, %c0_8] : memref<1x1x128xf32, #tpu.memory_space<vmem>>, vector<1x1x128xf32>
    %13 = vector.shape_cast %12 : vector<1x1x128xf32> to vector<1x128xf32>
    %c0_9 = arith.constant 0 : index
    %c0_10 = arith.constant 0 : index
    %c0_11 = arith.constant 0 : index
    %14 = vector.load %arg0[%c0_9, %c0_10, %c0_11] : memref<8x8x128xf32, #tpu.memory_space<vmem>>, vector<1x8x128xf32>
    %15 = vector.shape_cast %14 : vector<1x8x128xf32> to vector<8x128xf32>
    %cst_12 = arith.constant dense<0.000000e+00> : vector<8x128xf32>
    %16 = tpu.matmul %6, %9, %cst_12 {dimension_numbers = #tpu.dot_dimension_numbers<[1], [0], [0], [1], [0, 0, 1, 1], [], []>} : vector<8x32xf32>, vector<32x128xf32>, vector<8x128xf32> -> vector<8x128xf32>
    %17 = arith.addf %15, %16 : vector<8x128xf32>
    %18 = math.tanh %17 : vector<8x128xf32>
    %19 = arith.negf %17 : vector<8x128xf32>
    %20 = math.exp %19 : vector<8x128xf32>
    %cst_13 = arith.constant 1.000000e+00 : f32
    %21 = vector.broadcast %cst_13 : f32 to vector<8x128xf32>
    %22 = arith.addf %21, %20 : vector<8x128xf32>
    %23 = arith.divf %21, %22 : vector<8x128xf32>
    %24 = arith.select %5, %18, %23 : vector<8x128xi1>, vector<8x128xf32>
    %25 = vector.extract_strided_slice %24 {offsets = [0, 0], sizes = [8, 32], strides = [1, 1]} : vector<8x128xf32> to vector<8x32xf32>
    %26 = vector.extract_strided_slice %24 {offsets = [0, 32], sizes = [8, 32], strides = [1, 1]} : vector<8x128xf32> to vector<8x32xf32>
    %27 = vector.extract_strided_slice %24 {offsets = [0, 64], sizes = [8, 32], strides = [1, 1]} : vector<8x128xf32> to vector<8x32xf32>
    %28 = vector.extract_strided_slice %24 {offsets = [0, 96], sizes = [8, 32], strides = [1, 1]} : vector<8x128xf32> to vector<8x32xf32>
    %29 = arith.mulf %26, %7 : vector<8x32xf32>
    %30 = arith.mulf %25, %27 : vector<8x32xf32>
    %31 = arith.addf %29, %30 : vector<8x32xf32>
    %32 = math.tanh %31 : vector<8x32xf32>
    %33 = arith.mulf %28, %32 : vector<8x32xf32>
    %cst_14 = arith.constant dense<0.000000e+00> : vector<8x128xf32>
    %34 = tpu.matmul %33, %11, %cst_14 {dimension_numbers = #tpu.dot_dimension_numbers<[1], [0], [0], [1], [0, 0, 1, 1], [], []>} : vector<8x32xf32>, vector<32x128xf32>, vector<8x128xf32> -> vector<8x128xf32>
    %35 = vector.broadcast %13 : vector<1x128xf32> to vector<8x128xf32>
    %36 = arith.addf %34, %35 : vector<8x128xf32>
    %c0_15 = arith.constant 0 : index
    %c0_16 = arith.constant 0 : index
    %c0_17 = arith.constant 0 : index
    %37 = vector.load %arg7[%c0_15, %c0_16, %c0_17] : memref<8x8x128xf32, #tpu.memory_space<vmem>>, vector<1x8x128xf32>
    %38 = vector.shape_cast %37 : vector<1x8x128xf32> to vector<8x128xf32>
    %39 = vector.shape_cast %36 : vector<8x128xf32> to vector<1x8x128xf32>
    tpu.vector_store %arg7[%c0_15, %c0_16, %c0_17], %39 {strides = array<i32>} : memref<8x8x128xf32, #tpu.memory_space<vmem>>, vector<1x8x128xf32>,
    %c1 = arith.constant 1 : index
    %c0_18 = arith.constant 0 : index
    %c0_19 = arith.constant 0 : index
    %40 = vector.load %arg0[%c1, %c0_18, %c0_19] : memref<8x8x128xf32, #tpu.memory_space<vmem>>, vector<1x8x128xf32>
    %41 = vector.shape_cast %40 : vector<1x8x128xf32> to vector<8x128xf32>
    %cst_20 = arith.constant dense<0.000000e+00> : vector<8x128xf32>
    %42 = tpu.matmul %33, %9, %cst_20 {dimension_numbers = #tpu.dot_dimension_numbers<[1], [0], [0], [1], [0, 0, 1, 1], [], []>} : vector<8x32xf32>, vector<32x128xf32>, vector<8x128xf32> -> vector<8x128xf32>
    %43 = arith.addf %41, %42 : vector<8x128xf32>
    %44 = math.tanh %43 : vector<8x128xf32>
    %45 = arith.negf %43 : vector<8x128xf32>
    %46 = math.exp %45 : vector<8x128xf32>
    %cst_21 = arith.constant 1.000000e+00 : f32
    %47 = vector.broadcast %cst_21 : f32 to vector<8x128xf32>
    %48 = arith.addf %47, %46 : vector<8x128xf32>
    %49 = arith.divf %47, %48 : vector<8x128xf32>
    %50 = arith.select %5, %44, %49 : vector<8x128xi1>, vector<8x128xf32>
    %51 = vector.extract_strided_slice %50 {offsets = [0, 0], sizes = [8, 32], strides = [1, 1]} : vector<8x128xf32> to vector<8x32xf32>
    %52 = vector.extract_strided_slice %50 {offsets = [0, 32], sizes = [8, 32], strides = [1, 1]} : vector<8x128xf32> to vector<8x32xf32>
    %53 = vector.extract_strided_slice %50 {offsets = [0, 64], sizes = [8, 32], strides = [1, 1]} : vector<8x128xf32> to vector<8x32xf32>
    %54 = vector.extract_strided_slice %50 {offsets = [0, 96], sizes = [8, 32], strides = [1, 1]} : vector<8x128xf32> to vector<8x32xf32>
    %55 = arith.mulf %52, %31 : vector<8x32xf32>
    %56 = arith.mulf %51, %53 : vector<8x32xf32>
    %57 = arith.addf %55, %56 : vector<8x32xf32>
    %58 = math.tanh %57 : vector<8x32xf32>
    %59 = arith.mulf %54, %58 : vector<8x32xf32>
    %cst_22 = arith.constant dense<0.000000e+00> : vector<8x128xf32>
    %60 = tpu.matmul %59, %11, %cst_22 {dimension_numbers = #tpu.dot_dimension_numbers<[1], [0], [0], [1], [0, 0, 1, 1], [], []>} : vector<8x32xf32>, vector<32x128xf32>, vector<8x128xf32> -> vector<8x128xf32>
    %61 = vector.broadcast %13 : vector<1x128xf32> to vector<8x128xf32>
    %62 = arith.addf %60, %61 : vector<8x128xf32>
    %c1_23 = arith.constant 1 : index
    %c0_24 = arith.constant 0 : index
    %c0_25 = arith.constant 0 : index
    %63 = vector.load %arg7[%c1_23, %c0_24, %c0_25] : memref<8x8x128xf32, #tpu.memory_space<vmem>>, vector<1x8x128xf32>
    %64 = vector.shape_cast %63 : vector<1x8x128xf32> to vector<8x128xf32>
    %65 = vector.shape_cast %62 : vector<8x128xf32> to vector<1x8x128xf32>
    tpu.vector_store %arg7[%c1_23, %c0_24, %c0_25], %65 {strides = array<i32>} : memref<8x8x128xf32, #tpu.memory_space<vmem>>, vector<1x8x128xf32>,
    %c2 = arith.constant 2 : index
    %c0_26 = arith.constant 0 : index
    %c0_27 = arith.constant 0 : index
    %66 = vector.load %arg0[%c2, %c0_26, %c0_27] : memref<8x8x128xf32, #tpu.memory_space<vmem>>, vector<1x8x128xf32>
    %67 = vector.shape_cast %66 : vector<1x8x128xf32> to vector<8x128xf32>
    %cst_28 = arith.constant dense<0.000000e+00> : vector<8x128xf32>
    %68 = tpu.matmul %59, %9, %cst_28 {dimension_numbers = #tpu.dot_dimension_numbers<[1], [0], [0], [1], [0, 0, 1, 1], [], []>} : vector<8x32xf32>, vector<32x128xf32>, vector<8x128xf32> -> vector<8x128xf32>
    %69 = arith.addf %67, %68 : vector<8x128xf32>
    %70 = math.tanh %69 : vector<8x128xf32>
    %71 = arith.negf %69 : vector<8x128xf32>
    %72 = math.exp %71 : vector<8x128xf32>
    %cst_29 = arith.constant 1.000000e+00 : f32
    %73 = vector.broadcast %cst_29 : f32 to vector<8x128xf32>
    %74 = arith.addf %73, %72 : vector<8x128xf32>
    %75 = arith.divf %73, %74 : vector<8x128xf32>
    %76 = arith.select %5, %70, %75 : vector<8x128xi1>, vector<8x128xf32>
    %77 = vector.extract_strided_slice %76 {offsets = [0, 0], sizes = [8, 32], strides = [1, 1]} : vector<8x128xf32> to vector<8x32xf32>
    %78 = vector.extract_strided_slice %76 {offsets = [0, 32], sizes = [8, 32], strides = [1, 1]} : vector<8x128xf32> to vector<8x32xf32>
    %79 = vector.extract_strided_slice %76 {offsets = [0, 64], sizes = [8, 32], strides = [1, 1]} : vector<8x128xf32> to vector<8x32xf32>
    %80 = vector.extract_strided_slice %76 {offsets = [0, 96], sizes = [8, 32], strides = [1, 1]} : vector<8x128xf32> to vector<8x32xf32>
    %81 = arith.mulf %78, %57 : vector<8x32xf32>
    %82 = arith.mulf %77, %79 : vector<8x32xf32>
    %83 = arith.addf %81, %82 : vector<8x32xf32>
    %84 = math.tanh %83 : vector<8x32xf32>
    %85 = arith.mulf %80, %84 : vector<8x32xf32>
    %cst_30 = arith.constant dense<0.000000e+00> : vector<8x128xf32>
    %86 = tpu.matmul %85, %11, %cst_30 {dimension_numbers = #tpu.dot_dimension_numbers<[1], [0], [0], [1], [0, 0, 1, 1], [], []>} : vector<8x32xf32>, vector<32x128xf32>, vector<8x128xf32> -> vector<8x128xf32>
    %87 = vector.broadcast %13 : vector<1x128xf32> to vector<8x128xf32>
    %88 = arith.addf %86, %87 : vector<8x128xf32>
    %c2_31 = arith.constant 2 : index
    %c0_32 = arith.constant 0 : index
    %c0_33 = arith.constant 0 : index
    %89 = vector.load %arg7[%c2_31, %c0_32, %c0_33] : memref<8x8x128xf32, #tpu.memory_space<vmem>>, vector<1x8x128xf32>
    %90 = vector.shape_cast %89 : vector<1x8x128xf32> to vector<8x128xf32>
    %91 = vector.shape_cast %88 : vector<8x128xf32> to vector<1x8x128xf32>
    tpu.vector_store %arg7[%c2_31, %c0_32, %c0_33], %91 {strides = array<i32>} : memref<8x8x128xf32, #tpu.memory_space<vmem>>, vector<1x8x128xf32>,
    %c3 = arith.constant 3 : index
    %c0_34 = arith.constant 0 : index
    %c0_35 = arith.constant 0 : index
    %92 = vector.load %arg0[%c3, %c0_34, %c0_35] : memref<8x8x128xf32, #tpu.memory_space<vmem>>, vector<1x8x128xf32>
    %93 = vector.shape_cast %92 : vector<1x8x128xf32> to vector<8x128xf32>
    %cst_36 = arith.constant dense<0.000000e+00> : vector<8x128xf32>
    %94 = tpu.matmul %85, %9, %cst_36 {dimension_numbers = #tpu.dot_dimension_numbers<[1], [0], [0], [1], [0, 0, 1, 1], [], []>} : vector<8x32xf32>, vector<32x128xf32>, vector<8x128xf32> -> vector<8x128xf32>
    %95 = arith.addf %93, %94 : vector<8x128xf32>
    %96 = math.tanh %95 : vector<8x128xf32>
    %97 = arith.negf %95 : vector<8x128xf32>
    %98 = math.exp %97 : vector<8x128xf32>
    %cst_37 = arith.constant 1.000000e+00 : f32
    %99 = vector.broadcast %cst_37 : f32 to vector<8x128xf32>
    %100 = arith.addf %99, %98 : vector<8x128xf32>
    %101 = arith.divf %99, %100 : vector<8x128xf32>
    %102 = arith.select %5, %96, %101 : vector<8x128xi1>, vector<8x128xf32>
    %103 = vector.extract_strided_slice %102 {offsets = [0, 0], sizes = [8, 32], strides = [1, 1]} : vector<8x128xf32> to vector<8x32xf32>
    %104 = vector.extract_strided_slice %102 {offsets = [0, 32], sizes = [8, 32], strides = [1, 1]} : vector<8x128xf32> to vector<8x32xf32>
    %105 = vector.extract_strided_slice %102 {offsets = [0, 64], sizes = [8, 32], strides = [1, 1]} : vector<8x128xf32> to vector<8x32xf32>
    %106 = vector.extract_strided_slice %102 {offsets = [0, 96], sizes = [8, 32], strides = [1, 1]} : vector<8x128xf32> to vector<8x32xf32>
    %107 = arith.mulf %104, %83 : vector<8x32xf32>
    %108 = arith.mulf %103, %105 : vector<8x32xf32>
    %109 = arith.addf %107, %108 : vector<8x32xf32>
    %110 = math.tanh %109 : vector<8x32xf32>
    %111 = arith.mulf %106, %110 : vector<8x32xf32>
    %cst_38 = arith.constant dense<0.000000e+00> : vector<8x128xf32>
    %112 = tpu.matmul %111, %11, %cst_38 {dimension_numbers = #tpu.dot_dimension_numbers<[1], [0], [0], [1], [0, 0, 1, 1], [], []>} : vector<8x32xf32>, vector<32x128xf32>, vector<8x128xf32> -> vector<8x128xf32>
    %113 = vector.broadcast %13 : vector<1x128xf32> to vector<8x128xf32>
    %114 = arith.addf %112, %113 : vector<8x128xf32>
    %c3_39 = arith.constant 3 : index
    %c0_40 = arith.constant 0 : index
    %c0_41 = arith.constant 0 : index
    %115 = vector.load %arg7[%c3_39, %c0_40, %c0_41] : memref<8x8x128xf32, #tpu.memory_space<vmem>>, vector<1x8x128xf32>
    %116 = vector.shape_cast %115 : vector<1x8x128xf32> to vector<8x128xf32>
    %117 = vector.shape_cast %114 : vector<8x128xf32> to vector<1x8x128xf32>
    tpu.vector_store %arg7[%c3_39, %c0_40, %c0_41], %117 {strides = array<i32>} : memref<8x8x128xf32, #tpu.memory_space<vmem>>, vector<1x8x128xf32>,
    %c4 = arith.constant 4 : index
    %c0_42 = arith.constant 0 : index
    %c0_43 = arith.constant 0 : index
    %118 = vector.load %arg0[%c4, %c0_42, %c0_43] : memref<8x8x128xf32, #tpu.memory_space<vmem>>, vector<1x8x128xf32>
    %119 = vector.shape_cast %118 : vector<1x8x128xf32> to vector<8x128xf32>
    %cst_44 = arith.constant dense<0.000000e+00> : vector<8x128xf32>
    %120 = tpu.matmul %111, %9, %cst_44 {dimension_numbers = #tpu.dot_dimension_numbers<[1], [0], [0], [1], [0, 0, 1, 1], [], []>} : vector<8x32xf32>, vector<32x128xf32>, vector<8x128xf32> -> vector<8x128xf32>
    %121 = arith.addf %119, %120 : vector<8x128xf32>
    %122 = math.tanh %121 : vector<8x128xf32>
    %123 = arith.negf %121 : vector<8x128xf32>
    %124 = math.exp %123 : vector<8x128xf32>
    %cst_45 = arith.constant 1.000000e+00 : f32
    %125 = vector.broadcast %cst_45 : f32 to vector<8x128xf32>
    %126 = arith.addf %125, %124 : vector<8x128xf32>
    %127 = arith.divf %125, %126 : vector<8x128xf32>
    %128 = arith.select %5, %122, %127 : vector<8x128xi1>, vector<8x128xf32>
    %129 = vector.extract_strided_slice %128 {offsets = [0, 0], sizes = [8, 32], strides = [1, 1]} : vector<8x128xf32> to vector<8x32xf32>
    %130 = vector.extract_strided_slice %128 {offsets = [0, 32], sizes = [8, 32], strides = [1, 1]} : vector<8x128xf32> to vector<8x32xf32>
    %131 = vector.extract_strided_slice %128 {offsets = [0, 64], sizes = [8, 32], strides = [1, 1]} : vector<8x128xf32> to vector<8x32xf32>
    %132 = vector.extract_strided_slice %128 {offsets = [0, 96], sizes = [8, 32], strides = [1, 1]} : vector<8x128xf32> to vector<8x32xf32>
    %133 = arith.mulf %130, %109 : vector<8x32xf32>
    %134 = arith.mulf %129, %131 : vector<8x32xf32>
    %135 = arith.addf %133, %134 : vector<8x32xf32>
    %136 = math.tanh %135 : vector<8x32xf32>
    %137 = arith.mulf %132, %136 : vector<8x32xf32>
    %cst_46 = arith.constant dense<0.000000e+00> : vector<8x128xf32>
    %138 = tpu.matmul %137, %11, %cst_46 {dimension_numbers = #tpu.dot_dimension_numbers<[1], [0], [0], [1], [0, 0, 1, 1], [], []>} : vector<8x32xf32>, vector<32x128xf32>, vector<8x128xf32> -> vector<8x128xf32>
    %139 = vector.broadcast %13 : vector<1x128xf32> to vector<8x128xf32>
    %140 = arith.addf %138, %139 : vector<8x128xf32>
    %c4_47 = arith.constant 4 : index
    %c0_48 = arith.constant 0 : index
    %c0_49 = arith.constant 0 : index
    %141 = vector.load %arg7[%c4_47, %c0_48, %c0_49] : memref<8x8x128xf32, #tpu.memory_space<vmem>>, vector<1x8x128xf32>
    %142 = vector.shape_cast %141 : vector<1x8x128xf32> to vector<8x128xf32>
    %143 = vector.shape_cast %140 : vector<8x128xf32> to vector<1x8x128xf32>
    tpu.vector_store %arg7[%c4_47, %c0_48, %c0_49], %143 {strides = array<i32>} : memref<8x8x128xf32, #tpu.memory_space<vmem>>, vector<1x8x128xf32>,
    %c5 = arith.constant 5 : index
    %c0_50 = arith.constant 0 : index
    %c0_51 = arith.constant 0 : index
    %144 = vector.load %arg0[%c5, %c0_50, %c0_51] : memref<8x8x128xf32, #tpu.memory_space<vmem>>, vector<1x8x128xf32>
    %145 = vector.shape_cast %144 : vector<1x8x128xf32> to vector<8x128xf32>
    %cst_52 = arith.constant dense<0.000000e+00> : vector<8x128xf32>
    %146 = tpu.matmul %137, %9, %cst_52 {dimension_numbers = #tpu.dot_dimension_numbers<[1], [0], [0], [1], [0, 0, 1, 1], [], []>} : vector<8x32xf32>, vector<32x128xf32>, vector<8x128xf32> -> vector<8x128xf32>
    %147 = arith.addf %145, %146 : vector<8x128xf32>
    %148 = math.tanh %147 : vector<8x128xf32>
    %149 = arith.negf %147 : vector<8x128xf32>
    %150 = math.exp %149 : vector<8x128xf32>
    %cst_53 = arith.constant 1.000000e+00 : f32
    %151 = vector.broadcast %cst_53 : f32 to vector<8x128xf32>
    %152 = arith.addf %151, %150 : vector<8x128xf32>
    %153 = arith.divf %151, %152 : vector<8x128xf32>
    %154 = arith.select %5, %148, %153 : vector<8x128xi1>, vector<8x128xf32>
    %155 = vector.extract_strided_slice %154 {offsets = [0, 0], sizes = [8, 32], strides = [1, 1]} : vector<8x128xf32> to vector<8x32xf32>
    %156 = vector.extract_strided_slice %154 {offsets = [0, 32], sizes = [8, 32], strides = [1, 1]} : vector<8x128xf32> to vector<8x32xf32>
    %157 = vector.extract_strided_slice %154 {offsets = [0, 64], sizes = [8, 32], strides = [1, 1]} : vector<8x128xf32> to vector<8x32xf32>
    %158 = vector.extract_strided_slice %154 {offsets = [0, 96], sizes = [8, 32], strides = [1, 1]} : vector<8x128xf32> to vector<8x32xf32>
    %159 = arith.mulf %156, %135 : vector<8x32xf32>
    %160 = arith.mulf %155, %157 : vector<8x32xf32>
    %161 = arith.addf %159, %160 : vector<8x32xf32>
    %162 = math.tanh %161 : vector<8x32xf32>
    %163 = arith.mulf %158, %162 : vector<8x32xf32>
    %cst_54 = arith.constant dense<0.000000e+00> : vector<8x128xf32>
    %164 = tpu.matmul %163, %11, %cst_54 {dimension_numbers = #tpu.dot_dimension_numbers<[1], [0], [0], [1], [0, 0, 1, 1], [], []>} : vector<8x32xf32>, vector<32x128xf32>, vector<8x128xf32> -> vector<8x128xf32>
    %165 = vector.broadcast %13 : vector<1x128xf32> to vector<8x128xf32>
    %166 = arith.addf %164, %165 : vector<8x128xf32>
    %c5_55 = arith.constant 5 : index
    %c0_56 = arith.constant 0 : index
    %c0_57 = arith.constant 0 : index
    %167 = vector.load %arg7[%c5_55, %c0_56, %c0_57] : memref<8x8x128xf32, #tpu.memory_space<vmem>>, vector<1x8x128xf32>
    %168 = vector.shape_cast %167 : vector<1x8x128xf32> to vector<8x128xf32>
    %169 = vector.shape_cast %166 : vector<8x128xf32> to vector<1x8x128xf32>
    tpu.vector_store %arg7[%c5_55, %c0_56, %c0_57], %169 {strides = array<i32>} : memref<8x8x128xf32, #tpu.memory_space<vmem>>, vector<1x8x128xf32>,
    %c6 = arith.constant 6 : index
    %c0_58 = arith.constant 0 : index
    %c0_59 = arith.constant 0 : index
    %170 = vector.load %arg0[%c6, %c0_58, %c0_59] : memref<8x8x128xf32, #tpu.memory_space<vmem>>, vector<1x8x128xf32>
    %171 = vector.shape_cast %170 : vector<1x8x128xf32> to vector<8x128xf32>
    %cst_60 = arith.constant dense<0.000000e+00> : vector<8x128xf32>
    %172 = tpu.matmul %163, %9, %cst_60 {dimension_numbers = #tpu.dot_dimension_numbers<[1], [0], [0], [1], [0, 0, 1, 1], [], []>} : vector<8x32xf32>, vector<32x128xf32>, vector<8x128xf32> -> vector<8x128xf32>
    %173 = arith.addf %171, %172 : vector<8x128xf32>
    %174 = math.tanh %173 : vector<8x128xf32>
    %175 = arith.negf %173 : vector<8x128xf32>
    %176 = math.exp %175 : vector<8x128xf32>
    %cst_61 = arith.constant 1.000000e+00 : f32
    %177 = vector.broadcast %cst_61 : f32 to vector<8x128xf32>
    %178 = arith.addf %177, %176 : vector<8x128xf32>
    %179 = arith.divf %177, %178 : vector<8x128xf32>
    %180 = arith.select %5, %174, %179 : vector<8x128xi1>, vector<8x128xf32>
    %181 = vector.extract_strided_slice %180 {offsets = [0, 0], sizes = [8, 32], strides = [1, 1]} : vector<8x128xf32> to vector<8x32xf32>
    %182 = vector.extract_strided_slice %180 {offsets = [0, 32], sizes = [8, 32], strides = [1, 1]} : vector<8x128xf32> to vector<8x32xf32>
    %183 = vector.extract_strided_slice %180 {offsets = [0, 64], sizes = [8, 32], strides = [1, 1]} : vector<8x128xf32> to vector<8x32xf32>
    %184 = vector.extract_strided_slice %180 {offsets = [0, 96], sizes = [8, 32], strides = [1, 1]} : vector<8x128xf32> to vector<8x32xf32>
    %185 = arith.mulf %182, %161 : vector<8x32xf32>
    %186 = arith.mulf %181, %183 : vector<8x32xf32>
    %187 = arith.addf %185, %186 : vector<8x32xf32>
    %188 = math.tanh %187 : vector<8x32xf32>
    %189 = arith.mulf %184, %188 : vector<8x32xf32>
    %cst_62 = arith.constant dense<0.000000e+00> : vector<8x128xf32>
    %190 = tpu.matmul %189, %11, %cst_62 {dimension_numbers = #tpu.dot_dimension_numbers<[1], [0], [0], [1], [0, 0, 1, 1], [], []>} : vector<8x32xf32>, vector<32x128xf32>, vector<8x128xf32> -> vector<8x128xf32>
    %191 = vector.broadcast %13 : vector<1x128xf32> to vector<8x128xf32>
    %192 = arith.addf %190, %191 : vector<8x128xf32>
    %c6_63 = arith.constant 6 : index
    %c0_64 = arith.constant 0 : index
    %c0_65 = arith.constant 0 : index
    %193 = vector.load %arg7[%c6_63, %c0_64, %c0_65] : memref<8x8x128xf32, #tpu.memory_space<vmem>>, vector<1x8x128xf32>
    %194 = vector.shape_cast %193 : vector<1x8x128xf32> to vector<8x128xf32>
    %195 = vector.shape_cast %192 : vector<8x128xf32> to vector<1x8x128xf32>
    tpu.vector_store %arg7[%c6_63, %c0_64, %c0_65], %195 {strides = array<i32>} : memref<8x8x128xf32, #tpu.memory_space<vmem>>, vector<1x8x128xf32>,
    %c7 = arith.constant 7 : index
    %c0_66 = arith.constant 0 : index
    %c0_67 = arith.constant 0 : index
    %196 = vector.load %arg0[%c7, %c0_66, %c0_67] : memref<8x8x128xf32, #tpu.memory_space<vmem>>, vector<1x8x128xf32>
    %197 = vector.shape_cast %196 : vector<1x8x128xf32> to vector<8x128xf32>
    %cst_68 = arith.constant dense<0.000000e+00> : vector<8x128xf32>
    %198 = tpu.matmul %189, %9, %cst_68 {dimension_numbers = #tpu.dot_dimension_numbers<[1], [0], [0], [1], [0, 0, 1, 1], [], []>} : vector<8x32xf32>, vector<32x128xf32>, vector<8x128xf32> -> vector<8x128xf32>
    %199 = arith.addf %197, %198 : vector<8x128xf32>
    %200 = math.tanh %199 : vector<8x128xf32>
    %201 = arith.negf %199 : vector<8x128xf32>
    %202 = math.exp %201 : vector<8x128xf32>
    %cst_69 = arith.constant 1.000000e+00 : f32
    %203 = vector.broadcast %cst_69 : f32 to vector<8x128xf32>
    %204 = arith.addf %203, %202 : vector<8x128xf32>
    %205 = arith.divf %203, %204 : vector<8x128xf32>
    %206 = arith.select %5, %200, %205 : vector<8x128xi1>, vector<8x128xf32>
    %207 = vector.extract_strided_slice %206 {offsets = [0, 0], sizes = [8, 32], strides = [1, 1]} : vector<8x128xf32> to vector<8x32xf32>
    %208 = vector.extract_strided_slice %206 {offsets = [0, 32], sizes = [8, 32], strides = [1, 1]} : vector<8x128xf32> to vector<8x32xf32>
    %209 = vector.extract_strided_slice %206 {offsets = [0, 64], sizes = [8, 32], strides = [1, 1]} : vector<8x128xf32> to vector<8x32xf32>
    %210 = vector.extract_strided_slice %206 {offsets = [0, 96], sizes = [8, 32], strides = [1, 1]} : vector<8x128xf32> to vector<8x32xf32>
    %211 = arith.mulf %208, %187 : vector<8x32xf32>
    %212 = arith.mulf %207, %209 : vector<8x32xf32>
    %213 = arith.addf %211, %212 : vector<8x32xf32>
    %214 = math.tanh %213 : vector<8x32xf32>
    %215 = arith.mulf %210, %214 : vector<8x32xf32>
    %cst_70 = arith.constant dense<0.000000e+00> : vector<8x128xf32>
    %216 = tpu.matmul %215, %11, %cst_70 {dimension_numbers = #tpu.dot_dimension_numbers<[1], [0], [0], [1], [0, 0, 1, 1], [], []>} : vector<8x32xf32>, vector<32x128xf32>, vector<8x128xf32> -> vector<8x128xf32>
    %217 = vector.broadcast %13 : vector<1x128xf32> to vector<8x128xf32>
    %218 = arith.addf %216, %217 : vector<8x128xf32>
    %c7_71 = arith.constant 7 : index
    %c0_72 = arith.constant 0 : index
    %c0_73 = arith.constant 0 : index
    %219 = vector.load %arg7[%c7_71, %c0_72, %c0_73] : memref<8x8x128xf32, #tpu.memory_space<vmem>>, vector<1x8x128xf32>
    %220 = vector.shape_cast %219 : vector<1x8x128xf32> to vector<8x128xf32>
    %221 = vector.shape_cast %218 : vector<8x128xf32> to vector<1x8x128xf32>
    tpu.vector_store %arg7[%c7_71, %c0_72, %c0_73], %221 {strides = array<i32>} : memref<8x8x128xf32, #tpu.memory_space<vmem>>, vector<1x8x128xf32>,
    %cst_74 = arith.constant 0.000000e+00 : f32
    %222 = vector.broadcast %cst_74 : f32 to vector<8x32xf32>
    %cst_75 = arith.constant 0.000000e+00 : f32
    %223 = vector.broadcast %cst_75 : f32 to vector<8x32xf32>
    %c1_76 = arith.constant 1 : index
    %c0_77 = arith.constant 0 : index
    %c0_78 = arith.constant 0 : index
    %224 = vector.load %arg1[%c1_76, %c0_77, %c0_78] : memref<2x32x128xf32, #tpu.memory_space<vmem>>, vector<1x32x128xf32>
    %225 = vector.shape_cast %224 : vector<1x32x128xf32> to vector<32x128xf32>
    %c0_79 = arith.constant 0 : index
    %c0_80 = arith.constant 0 : index
    %c0_81 = arith.constant 0 : index
    %226 = vector.load %arg7[%c0_79, %c0_80, %c0_81] : memref<8x8x128xf32, #tpu.memory_space<vmem>>, vector<1x8x128xf32>
    %227 = vector.shape_cast %226 : vector<1x8x128xf32> to vector<8x128xf32>
    %cst_82 = arith.constant dense<0.000000e+00> : vector<8x128xf32>
    %228 = tpu.matmul %222, %225, %cst_82 {dimension_numbers = #tpu.dot_dimension_numbers<[1], [0], [0], [1], [0, 0, 1, 1], [], []>} : vector<8x32xf32>, vector<32x128xf32>, vector<8x128xf32> -> vector<8x128xf32>
    %229 = arith.addf %227, %228 : vector<8x128xf32>
    %230 = math.tanh %229 : vector<8x128xf32>
    %231 = arith.negf %229 : vector<8x128xf32>
    %232 = math.exp %231 : vector<8x128xf32>
    %cst_83 = arith.constant 1.000000e+00 : f32
    %233 = vector.broadcast %cst_83 : f32 to vector<8x128xf32>
    %234 = arith.addf %233, %232 : vector<8x128xf32>
    %235 = arith.divf %233, %234 : vector<8x128xf32>
    %236 = arith.select %5, %230, %235 : vector<8x128xi1>, vector<8x128xf32>
    %237 = vector.extract_strided_slice %236 {offsets = [0, 0], sizes = [8, 32], strides = [1, 1]} : vector<8x128xf32> to vector<8x32xf32>
    %238 = vector.extract_strided_slice %236 {offsets = [0, 32], sizes = [8, 32], strides = [1, 1]} : vector<8x128xf32> to vector<8x32xf32>
    %239 = vector.extract_strided_slice %236 {offsets = [0, 64], sizes = [8, 32], strides = [1, 1]} : vector<8x128xf32> to vector<8x32xf32>
    %240 = vector.extract_strided_slice %236 {offsets = [0, 96], sizes = [8, 32], strides = [1, 1]} : vector<8x128xf32> to vector<8x32xf32>
    %241 = arith.mulf %238, %223 : vector<8x32xf32>
    %242 = arith.mulf %237, %239 : vector<8x32xf32>
    %243 = arith.addf %241, %242 : vector<8x32xf32>
    %244 = math.tanh %243 : vector<8x32xf32>
    %245 = arith.mulf %240, %244 : vector<8x32xf32>
    %c1_84 = arith.constant 1 : index
    %c0_85 = arith.constant 0 : index
    %c0_86 = arith.constant 0 : index
    %246 = vector.load %arg7[%c1_84, %c0_85, %c0_86] : memref<8x8x128xf32, #tpu.memory_space<vmem>>, vector<1x8x128xf32>
    %247 = vector.shape_cast %246 : vector<1x8x128xf32> to vector<8x128xf32>
    %cst_87 = arith.constant dense<0.000000e+00> : vector<8x128xf32>
    %248 = tpu.matmul %245, %225, %cst_87 {dimension_numbers = #tpu.dot_dimension_numbers<[1], [0], [0], [1], [0, 0, 1, 1], [], []>} : vector<8x32xf32>, vector<32x128xf32>, vector<8x128xf32> -> vector<8x128xf32>
    %249 = arith.addf %247, %248 : vector<8x128xf32>
    %250 = math.tanh %249 : vector<8x128xf32>
    %251 = arith.negf %249 : vector<8x128xf32>
    %252 = math.exp %251 : vector<8x128xf32>
    %cst_88 = arith.constant 1.000000e+00 : f32
    %253 = vector.broadcast %cst_88 : f32 to vector<8x128xf32>
    %254 = arith.addf %253, %252 : vector<8x128xf32>
    %255 = arith.divf %253, %254 : vector<8x128xf32>
    %256 = arith.select %5, %250, %255 : vector<8x128xi1>, vector<8x128xf32>
    %257 = vector.extract_strided_slice %256 {offsets = [0, 0], sizes = [8, 32], strides = [1, 1]} : vector<8x128xf32> to vector<8x32xf32>
    %258 = vector.extract_strided_slice %256 {offsets = [0, 32], sizes = [8, 32], strides = [1, 1]} : vector<8x128xf32> to vector<8x32xf32>
    %259 = vector.extract_strided_slice %256 {offsets = [0, 64], sizes = [8, 32], strides = [1, 1]} : vector<8x128xf32> to vector<8x32xf32>
    %260 = vector.extract_strided_slice %256 {offsets = [0, 96], sizes = [8, 32], strides = [1, 1]} : vector<8x128xf32> to vector<8x32xf32>
    %261 = arith.mulf %258, %243 : vector<8x32xf32>
    %262 = arith.mulf %257, %259 : vector<8x32xf32>
    %263 = arith.addf %261, %262 : vector<8x32xf32>
    %264 = math.tanh %263 : vector<8x32xf32>
    %265 = arith.mulf %260, %264 : vector<8x32xf32>
    %c2_89 = arith.constant 2 : index
    %c0_90 = arith.constant 0 : index
    %c0_91 = arith.constant 0 : index
    %266 = vector.load %arg7[%c2_89, %c0_90, %c0_91] : memref<8x8x128xf32, #tpu.memory_space<vmem>>, vector<1x8x128xf32>
    %267 = vector.shape_cast %266 : vector<1x8x128xf32> to vector<8x128xf32>
    %cst_92 = arith.constant dense<0.000000e+00> : vector<8x128xf32>
    %268 = tpu.matmul %265, %225, %cst_92 {dimension_numbers = #tpu.dot_dimension_numbers<[1], [0], [0], [1], [0, 0, 1, 1], [], []>} : vector<8x32xf32>, vector<32x128xf32>, vector<8x128xf32> -> vector<8x128xf32>
    %269 = arith.addf %267, %268 : vector<8x128xf32>
    %270 = math.tanh %269 : vector<8x128xf32>
    %271 = arith.negf %269 : vector<8x128xf32>
    %272 = math.exp %271 : vector<8x128xf32>
    %cst_93 = arith.constant 1.000000e+00 : f32
    %273 = vector.broadcast %cst_93 : f32 to vector<8x128xf32>
    %274 = arith.addf %273, %272 : vector<8x128xf32>
    %275 = arith.divf %273, %274 : vector<8x128xf32>
    %276 = arith.select %5, %270, %275 : vector<8x128xi1>, vector<8x128xf32>
    %277 = vector.extract_strided_slice %276 {offsets = [0, 0], sizes = [8, 32], strides = [1, 1]} : vector<8x128xf32> to vector<8x32xf32>
    %278 = vector.extract_strided_slice %276 {offsets = [0, 32], sizes = [8, 32], strides = [1, 1]} : vector<8x128xf32> to vector<8x32xf32>
    %279 = vector.extract_strided_slice %276 {offsets = [0, 64], sizes = [8, 32], strides = [1, 1]} : vector<8x128xf32> to vector<8x32xf32>
    %280 = vector.extract_strided_slice %276 {offsets = [0, 96], sizes = [8, 32], strides = [1, 1]} : vector<8x128xf32> to vector<8x32xf32>
    %281 = arith.mulf %278, %263 : vector<8x32xf32>
    %282 = arith.mulf %277, %279 : vector<8x32xf32>
    %283 = arith.addf %281, %282 : vector<8x32xf32>
    %284 = math.tanh %283 : vector<8x32xf32>
    %285 = arith.mulf %280, %284 : vector<8x32xf32>
    %c3_94 = arith.constant 3 : index
    %c0_95 = arith.constant 0 : index
    %c0_96 = arith.constant 0 : index
    %286 = vector.load %arg7[%c3_94, %c0_95, %c0_96] : memref<8x8x128xf32, #tpu.memory_space<vmem>>, vector<1x8x128xf32>
    %287 = vector.shape_cast %286 : vector<1x8x128xf32> to vector<8x128xf32>
    %cst_97 = arith.constant dense<0.000000e+00> : vector<8x128xf32>
    %288 = tpu.matmul %285, %225, %cst_97 {dimension_numbers = #tpu.dot_dimension_numbers<[1], [0], [0], [1], [0, 0, 1, 1], [], []>} : vector<8x32xf32>, vector<32x128xf32>, vector<8x128xf32> -> vector<8x128xf32>
    %289 = arith.addf %287, %288 : vector<8x128xf32>
    %290 = math.tanh %289 : vector<8x128xf32>
    %291 = arith.negf %289 : vector<8x128xf32>
    %292 = math.exp %291 : vector<8x128xf32>
    %cst_98 = arith.constant 1.000000e+00 : f32
    %293 = vector.broadcast %cst_98 : f32 to vector<8x128xf32>
    %294 = arith.addf %293, %292 : vector<8x128xf32>
    %295 = arith.divf %293, %294 : vector<8x128xf32>
    %296 = arith.select %5, %290, %295 : vector<8x128xi1>, vector<8x128xf32>
    %297 = vector.extract_strided_slice %296 {offsets = [0, 0], sizes = [8, 32], strides = [1, 1]} : vector<8x128xf32> to vector<8x32xf32>
    %298 = vector.extract_strided_slice %296 {offsets = [0, 32], sizes = [8, 32], strides = [1, 1]} : vector<8x128xf32> to vector<8x32xf32>
    %299 = vector.extract_strided_slice %296 {offsets = [0, 64], sizes = [8, 32], strides = [1, 1]} : vector<8x128xf32> to vector<8x32xf32>
    %300 = vector.extract_strided_slice %296 {offsets = [0, 96], sizes = [8, 32], strides = [1, 1]} : vector<8x128xf32> to vector<8x32xf32>
    %301 = arith.mulf %298, %283 : vector<8x32xf32>
    %302 = arith.mulf %297, %299 : vector<8x32xf32>
    %303 = arith.addf %301, %302 : vector<8x32xf32>
    %304 = math.tanh %303 : vector<8x32xf32>
    %305 = arith.mulf %300, %304 : vector<8x32xf32>
    %c4_99 = arith.constant 4 : index
    %c0_100 = arith.constant 0 : index
    %c0_101 = arith.constant 0 : index
    %306 = vector.load %arg7[%c4_99, %c0_100, %c0_101] : memref<8x8x128xf32, #tpu.memory_space<vmem>>, vector<1x8x128xf32>
    %307 = vector.shape_cast %306 : vector<1x8x128xf32> to vector<8x128xf32>
    %cst_102 = arith.constant dense<0.000000e+00> : vector<8x128xf32>
    %308 = tpu.matmul %305, %225, %cst_102 {dimension_numbers = #tpu.dot_dimension_numbers<[1], [0], [0], [1], [0, 0, 1, 1], [], []>} : vector<8x32xf32>, vector<32x128xf32>, vector<8x128xf32> -> vector<8x128xf32>
    %309 = arith.addf %307, %308 : vector<8x128xf32>
    %310 = math.tanh %309 : vector<8x128xf32>
    %311 = arith.negf %309 : vector<8x128xf32>
    %312 = math.exp %311 : vector<8x128xf32>
    %cst_103 = arith.constant 1.000000e+00 : f32
    %313 = vector.broadcast %cst_103 : f32 to vector<8x128xf32>
    %314 = arith.addf %313, %312 : vector<8x128xf32>
    %315 = arith.divf %313, %314 : vector<8x128xf32>
    %316 = arith.select %5, %310, %315 : vector<8x128xi1>, vector<8x128xf32>
    %317 = vector.extract_strided_slice %316 {offsets = [0, 0], sizes = [8, 32], strides = [1, 1]} : vector<8x128xf32> to vector<8x32xf32>
    %318 = vector.extract_strided_slice %316 {offsets = [0, 32], sizes = [8, 32], strides = [1, 1]} : vector<8x128xf32> to vector<8x32xf32>
    %319 = vector.extract_strided_slice %316 {offsets = [0, 64], sizes = [8, 32], strides = [1, 1]} : vector<8x128xf32> to vector<8x32xf32>
    %320 = vector.extract_strided_slice %316 {offsets = [0, 96], sizes = [8, 32], strides = [1, 1]} : vector<8x128xf32> to vector<8x32xf32>
    %321 = arith.mulf %318, %303 : vector<8x32xf32>
    %322 = arith.mulf %317, %319 : vector<8x32xf32>
    %323 = arith.addf %321, %322 : vector<8x32xf32>
    %324 = math.tanh %323 : vector<8x32xf32>
    %325 = arith.mulf %320, %324 : vector<8x32xf32>
    %c5_104 = arith.constant 5 : index
    %c0_105 = arith.constant 0 : index
    %c0_106 = arith.constant 0 : index
    %326 = vector.load %arg7[%c5_104, %c0_105, %c0_106] : memref<8x8x128xf32, #tpu.memory_space<vmem>>, vector<1x8x128xf32>
    %327 = vector.shape_cast %326 : vector<1x8x128xf32> to vector<8x128xf32>
    %cst_107 = arith.constant dense<0.000000e+00> : vector<8x128xf32>
    %328 = tpu.matmul %325, %225, %cst_107 {dimension_numbers = #tpu.dot_dimension_numbers<[1], [0], [0], [1], [0, 0, 1, 1], [], []>} : vector<8x32xf32>, vector<32x128xf32>, vector<8x128xf32> -> vector<8x128xf32>
    %329 = arith.addf %327, %328 : vector<8x128xf32>
    %330 = math.tanh %329 : vector<8x128xf32>
    %331 = arith.negf %329 : vector<8x128xf32>
    %332 = math.exp %331 : vector<8x128xf32>
    %cst_108 = arith.constant 1.000000e+00 : f32
    %333 = vector.broadcast %cst_108 : f32 to vector<8x128xf32>
    %334 = arith.addf %333, %332 : vector<8x128xf32>
    %335 = arith.divf %333, %334 : vector<8x128xf32>
    %336 = arith.select %5, %330, %335 : vector<8x128xi1>, vector<8x128xf32>
    %337 = vector.extract_strided_slice %336 {offsets = [0, 0], sizes = [8, 32], strides = [1, 1]} : vector<8x128xf32> to vector<8x32xf32>
    %338 = vector.extract_strided_slice %336 {offsets = [0, 32], sizes = [8, 32], strides = [1, 1]} : vector<8x128xf32> to vector<8x32xf32>
    %339 = vector.extract_strided_slice %336 {offsets = [0, 64], sizes = [8, 32], strides = [1, 1]} : vector<8x128xf32> to vector<8x32xf32>
    %340 = vector.extract_strided_slice %336 {offsets = [0, 96], sizes = [8, 32], strides = [1, 1]} : vector<8x128xf32> to vector<8x32xf32>
    %341 = arith.mulf %338, %323 : vector<8x32xf32>
    %342 = arith.mulf %337, %339 : vector<8x32xf32>
    %343 = arith.addf %341, %342 : vector<8x32xf32>
    %344 = math.tanh %343 : vector<8x32xf32>
    %345 = arith.mulf %340, %344 : vector<8x32xf32>
    %c6_109 = arith.constant 6 : index
    %c0_110 = arith.constant 0 : index
    %c0_111 = arith.constant 0 : index
    %346 = vector.load %arg7[%c6_109, %c0_110, %c0_111] : memref<8x8x128xf32, #tpu.memory_space<vmem>>, vector<1x8x128xf32>
    %347 = vector.shape_cast %346 : vector<1x8x128xf32> to vector<8x128xf32>
    %cst_112 = arith.constant dense<0.000000e+00> : vector<8x128xf32>
    %348 = tpu.matmul %345, %225, %cst_112 {dimension_numbers = #tpu.dot_dimension_numbers<[1], [0], [0], [1], [0, 0, 1, 1], [], []>} : vector<8x32xf32>, vector<32x128xf32>, vector<8x128xf32> -> vector<8x128xf32>
    %349 = arith.addf %347, %348 : vector<8x128xf32>
    %350 = math.tanh %349 : vector<8x128xf32>
    %351 = arith.negf %349 : vector<8x128xf32>
    %352 = math.exp %351 : vector<8x128xf32>
    %cst_113 = arith.constant 1.000000e+00 : f32
    %353 = vector.broadcast %cst_113 : f32 to vector<8x128xf32>
    %354 = arith.addf %353, %352 : vector<8x128xf32>
    %355 = arith.divf %353, %354 : vector<8x128xf32>
    %356 = arith.select %5, %350, %355 : vector<8x128xi1>, vector<8x128xf32>
    %357 = vector.extract_strided_slice %356 {offsets = [0, 0], sizes = [8, 32], strides = [1, 1]} : vector<8x128xf32> to vector<8x32xf32>
    %358 = vector.extract_strided_slice %356 {offsets = [0, 32], sizes = [8, 32], strides = [1, 1]} : vector<8x128xf32> to vector<8x32xf32>
    %359 = vector.extract_strided_slice %356 {offsets = [0, 64], sizes = [8, 32], strides = [1, 1]} : vector<8x128xf32> to vector<8x32xf32>
    %360 = vector.extract_strided_slice %356 {offsets = [0, 96], sizes = [8, 32], strides = [1, 1]} : vector<8x128xf32> to vector<8x32xf32>
    %361 = arith.mulf %358, %343 : vector<8x32xf32>
    %362 = arith.mulf %357, %359 : vector<8x32xf32>
    %363 = arith.addf %361, %362 : vector<8x32xf32>
    %364 = math.tanh %363 : vector<8x32xf32>
    %365 = arith.mulf %360, %364 : vector<8x32xf32>
    %c7_114 = arith.constant 7 : index
    %c0_115 = arith.constant 0 : index
    %c0_116 = arith.constant 0 : index
    %366 = vector.load %arg7[%c7_114, %c0_115, %c0_116] : memref<8x8x128xf32, #tpu.memory_space<vmem>>, vector<1x8x128xf32>
    %367 = vector.shape_cast %366 : vector<1x8x128xf32> to vector<8x128xf32>
    %cst_117 = arith.constant dense<0.000000e+00> : vector<8x128xf32>
    %368 = tpu.matmul %365, %225, %cst_117 {dimension_numbers = #tpu.dot_dimension_numbers<[1], [0], [0], [1], [0, 0, 1, 1], [], []>} : vector<8x32xf32>, vector<32x128xf32>, vector<8x128xf32> -> vector<8x128xf32>
    %369 = arith.addf %367, %368 : vector<8x128xf32>
    %370 = math.tanh %369 : vector<8x128xf32>
    %371 = arith.negf %369 : vector<8x128xf32>
    %372 = math.exp %371 : vector<8x128xf32>
    %cst_118 = arith.constant 1.000000e+00 : f32
    %373 = vector.broadcast %cst_118 : f32 to vector<8x128xf32>
    %374 = arith.addf %373, %372 : vector<8x128xf32>
    %375 = arith.divf %373, %374 : vector<8x128xf32>
    %376 = arith.select %5, %370, %375 : vector<8x128xi1>, vector<8x128xf32>
    %377 = vector.extract_strided_slice %376 {offsets = [0, 0], sizes = [8, 32], strides = [1, 1]} : vector<8x128xf32> to vector<8x32xf32>
    %378 = vector.extract_strided_slice %376 {offsets = [0, 32], sizes = [8, 32], strides = [1, 1]} : vector<8x128xf32> to vector<8x32xf32>
    %379 = vector.extract_strided_slice %376 {offsets = [0, 64], sizes = [8, 32], strides = [1, 1]} : vector<8x128xf32> to vector<8x32xf32>
    %380 = vector.extract_strided_slice %376 {offsets = [0, 96], sizes = [8, 32], strides = [1, 1]} : vector<8x128xf32> to vector<8x32xf32>
    %381 = arith.mulf %378, %363 : vector<8x32xf32>
    %382 = arith.mulf %377, %379 : vector<8x32xf32>
    %383 = arith.addf %381, %382 : vector<8x32xf32>
    %384 = math.tanh %383 : vector<8x32xf32>
    %385 = arith.mulf %380, %384 : vector<8x32xf32>
    %c0_119 = arith.constant 0 : index
    %c0_120 = arith.constant 0 : index
    %386 = vector.load %arg4[%c0_119, %c0_120] : memref<32x128xf32, #tpu.memory_space<vmem>>, vector<32x128xf32>
    %cst_121 = arith.constant dense<0.000000e+00> : vector<8x128xf32>
    %387 = tpu.matmul %385, %386, %cst_121 {dimension_numbers = #tpu.dot_dimension_numbers<[1], [0], [0], [1], [0, 0, 1, 1], [], []>} : vector<8x32xf32>, vector<32x128xf32>, vector<8x128xf32> -> vector<8x128xf32>
    %c0_122 = arith.constant 0 : index
    %c0_123 = arith.constant 0 : index
    %388 = vector.load %arg5[%c0_122, %c0_123] : memref<1x128xf32, #tpu.memory_space<vmem>>, vector<1x128xf32>
    %389 = vector.broadcast %388 : vector<1x128xf32> to vector<8x128xf32>
    %390 = arith.addf %387, %389 : vector<8x128xf32>
    %c0_124 = arith.constant 0 : index
    %c0_125 = arith.constant 0 : index
    %391 = vector.load %arg6[%c0_124, %c0_125] : memref<8x128xf32, #tpu.memory_space<vmem>>, vector<8x128xf32>
    tpu.vector_store %arg6[%c0_124, %c0_125], %390 {strides = array<i32>} : memref<8x128xf32, #tpu.memory_space<vmem>>, vector<8x128xf32>,
    return
  }
}

</mosaic_0001>

<llo_original>
// kernel: lstm_model_forward.1
$region0: #{lstm_model_forward.1}
  #allocation0 [shape = 'u32[]', space=smem, size = 0x4, offset = 0x4, fixed_abs, tag = 'smem constant byte address 0x4 - core index']
  #allocation1 [shape = 'u32[144,128]{1,0:T(1,128)}', space=vmem, size = 0x12000, scoped, tag = 'internal scratch']
  #allocation2 [shape = 'f32[8,8,128]{2,1,0:T(8,128)}', space=vmem, size = 0x8000, scoped, tag = 'scratch operand']
  %s0 = inlined_call_operand.vmem [shape: f32[8,8,128], index: 0, kind: input, shape index: {}]
  %s1 = inlined_call_operand.vmem [shape: f32[2,32,128], index: 1, kind: input, shape index: {}]
  %s2 = inlined_call_operand.vmem [shape: f32[1,32,128], index: 2, kind: input, shape index: {}]
  %s3 = inlined_call_operand.vmem [shape: f32[1,1,128], index: 3, kind: input, shape index: {}]
  %s4 = inlined_call_operand.vmem [shape: f32[32,128], index: 4, kind: input, shape index: {}]
  %s5 = inlined_call_operand.vmem [shape: f32[1,128], index: 5, kind: input, shape index: {}]
  %s6 = inlined_call_operand.vmem [shape: f32[8,128], index: 6, kind: output, shape index: {}]
  %s7 = sld [smem:[#allocation0]]
  $region34: #{lstm_model_forward.1} parent=0
    _
  %s9 = ssub.s32 1, %s7
  %s10 = scalar_select 0, %s9, %s7
  // Predicated region
  $region2: #{lstm_model_forward.1} parent=0 // pred_check
    _
  $region3: #{lstm_model_forward.1} parent=0 // pred_check_branch
    %12 = sbr.rel (0) target = $region5
  $region4: #{lstm_model_forward.1} parent=0 // pred_region
    _
  $region5: #{lstm_model_forward.1} parent=0 // pred_fallthru
    _
  // Predicated region
  $region6: #{lstm_model_forward.1} parent=0 // pred_check
    _
  $region7: #{lstm_model_forward.1} parent=0 // pred_check_branch
    %14 = sbr.rel (0) target = $region9
  $region8: #{lstm_model_forward.1} parent=0 // pred_region
    _
  $region9: #{lstm_model_forward.1} parent=0 // pred_fallthru
    _
  // Predicated region
  $region10: #{lstm_model_forward.1} parent=0 // pred_check
    _
  $region11: #{lstm_model_forward.1} parent=0 // pred_check_branch
    %16 = sbr.rel (0) target = $region13
  $region12: #{lstm_model_forward.1} parent=0 // pred_region
    _
  $region13: #{lstm_model_forward.1} parent=0 // pred_fallthru
    _
  // Predicated region
  $region14: #{lstm_model_forward.1} parent=0 // pred_check
    _
  $region15: #{lstm_model_forward.1} parent=0 // pred_check_branch
    %18 = sbr.rel (0) target = $region17
  $region16: #{lstm_model_forward.1} parent=0 // pred_region
    _
  $region17: #{lstm_model_forward.1} parent=0 // pred_fallthru
    _
  // Predicated region
  $region18: #{lstm_model_forward.1} parent=0 // pred_check
    _
  $region19: #{lstm_model_forward.1} parent=0 // pred_check_branch
    %20 = sbr.rel (0) target = $region21
  $region20: #{lstm_model_forward.1} parent=0 // pred_region
    _
  $region21: #{lstm_model_forward.1} parent=0 // pred_fallthru
    _
  // Predicated region
  $region22: #{lstm_model_forward.1} parent=0 // pred_check
    _
  $region23: #{lstm_model_forward.1} parent=0 // pred_check_branch
    %22 = sbr.rel (0) target = $region25
  $region24: #{lstm_model_forward.1} parent=0 // pred_region
    _
  $region25: #{lstm_model_forward.1} parent=0 // pred_fallthru
    _
  %v23 = vlaneseq
  %v24 = vand.u32 %v23, 127
  %vm25 = vcmp.ge.s32.totalorder %v24, 64
  %vm26 = vcmp.lt.s32.totalorder %v24, 96
  %vm27 = vmand %vm25, %vm26
  %v28 = vld [vmem:[%s1] sm:$0xff]
  %v29 = vld [vmem:[%s1 + $0x8] sm:$0xff]
  %v30 = vld [vmem:[%s1 + $0x10] sm:$0xff]
  %v31 = vld [vmem:[%s1 + $0x18] sm:$0xff]
  %v32 = vld [vmem:[%s2] sm:$0xff]
  %v33 = vld [vmem:[%s2 + $0x8] sm:$0xff]
  %v34 = vld [vmem:[%s2 + $0x10] sm:$0xff]
  %v35 = vld [vmem:[%s2 + $0x18] sm:$0xff]
  %v36 = vld [vmem:[%s3] sm:$0x1]
  %v37 = vld [vmem:[%s0] sm:$0xff]
  %vm38 = vcmask 261120
  %v40 = vsel %vm38, 0.0, 0
  %42 = vmatprep.subr.mxu0 0.0
  %43 = vmatpush1.msra.mxu0 %v28
  %44 = vmatprep.subr.mxu0 0.0
  %45 = vmatpush1.msra.mxu0 %v29
  %46 = vmatprep.subr.mxu0 0.0
  %47 = vmatpush1.msra.mxu0 %v30
  %48 = vmatprep.subr.mxu0 0.0
  %49 = vmatpush1.msra.mxu0 %v31
  %50 = vmatprep.subr.mxu0 0.0
  %51 = vmatpush1.msra.mxu0 0.0
  %52 = vmatprep.subr.mxu0 0.0
  %53 = vmatpush1.msra.mxu0 0.0
  %54 = vmatprep.subr.mxu0 0.0
  %55 = vmatpush1.msra.mxu0 0.0
  %56 = vmatprep.subr.mxu0 0.0
  %57 = vmatpush1.msra.mxu0 0.0
  %58 = vmatprep.subr.mxu0 0.0
  %59 = vmatpush1.msra.mxu0 0.0
  %60 = vmatprep.subr.mxu0 0.0
  %61 = vmatpush1.msra.mxu0 0.0
  %62 = vmatprep.subr.mxu0 0.0
  %63 = vmatpush1.msra.mxu0 0.0
  %64 = vmatprep.subr.mxu0 0.0
  %65 = vmatpush1.msra.mxu0 0.0
  %66 = vmatprep.subr.mxu0 0.0
  %67 = vmatpush1.msra.mxu0 0.0
  %68 = vmatprep.subr.mxu0 0.0
  %69 = vmatpush1.msra.mxu0 0.0
  %70 = vmatprep.subr.mxu0 0.0
  %71 = vmatpush1.msra.mxu0 0.0
  %72 = vmatprep.subr.mxu0 0.0
  %73 = vmatpush1.msra.mxu0 0.0
  %74 = vmatprep.subr.mxu0 0.0
  %75 = vmatpush1.msra.mxu0 0.0
  %76 = vmatprep.subr.mxu0 0.0
  %77 = vmatpush1.msra.mxu0 0.0
  %78 = vmatprep.subr.mxu0 0.0
  %79 = vmatpush1.msra.mxu0 0.0
  %80 = vmatprep.subr.mxu0 0.0
  %81 = vmatpush1.msra.mxu0 0.0
  %82 = vmatprep.subr.mxu0 0.0
  %83 = vmatpush1.msra.mxu0 0.0
  %84 = vmatprep.subr.mxu0 0.0
  %85 = vmatpush1.msra.mxu0 0.0
  %86 = vmatprep.subr.mxu0 0.0
  %87 = vmatpush1.msra.mxu0 0.0
  %88 = vmatprep.subr.mxu0 0.0
  %89 = vmatpush1.msra.mxu0 0.0
  %90 = vmatprep.subr.mxu0 0.0
  %91 = vmatpush1.msra.mxu0 0.0
  %92 = vmatprep.subr.mxu0 0.0
  %93 = vmatpush1.msra.mxu0 0.0
  %94 = vmatprep.subr.mxu0 0.0
  %95 = vmatpush1.msra.mxu0 0.0
  %96 = vmatprep.subr.mxu0 0.0
  %97 = vmatpush1.msra.mxu0 0.0
  %98 = vmatprep.subr.mxu0 0.0
  %99 = vmatpush1.msra.mxu0 0.0
  %100 = vmatprep.subr.mxu0 0.0
  %101 = vmatpush1.msra.mxu0 0.0
  %102 = vmatprep.subr.mxu0 0.0
  %103 = vmatpush1.msra.mxu0 0.0
  %104 = vmatprep.subr.mxu0 0.0
  %105 = vmatpush1.msra.mxu0 0.0
  %106 = vmatprep.mubr.f32.mxu0 0.0
  %107 = vmatmul.mubr.f32.gmra.mrb[0].mxu0 %v40
  %v108 = vpop.f32.mrb[0].mxu0
  %v109 = vadd.f32 0.0, %v108
  %v110 = vpop.f32.mrb[0].mxu0
  %111 = vdwg.mxu0
  %v112 = vadd.f32 %v37, %v109
  %v113 = vtanh.pop %v112
  %v114 = vxor.u32 %v112, 2147483648
  %v115 = vmul.f32 %v114, 1.442695
  %v116 = vpow.pop %v115
  %v117 = vadd.f32 %v116, 1.0
  %v118 = vrcp.pop %v117
  %v119 = vmul.f32 1.0, %v118
  %v120 = vsel %vm27, %v113, %v119
  %v121 = vmul.f32 %v120, 0.0
  %123 = vrot.lane.b32.xlu0 %v120, 64
  %v124 = vpop.permute.xlu0 %123
  %v126 = vmul.f32 %v120, %v124
  %128 = vrot.lane.b32.xlu0 %v126, 32
  %v129 = vpop.permute.xlu0 %128
  %v131 = vadd.f32 %v121, %v129
  %v132 = vtanh.pop %v131
  %134 = vrot.lane.b32.xlu0 %v132, 64
  %v135 = vpop.permute.xlu0 %134
  %v137 = vmul.f32 %v120, %v135
  %v139 = vlaneseq
  %v140 = vshrl.u32 %v139, 7
  %v141 = vsub.s32 0, %v140
  %v142 = vrot.slane %v36, %v141
  %145 = vrot.lane.b32.xlu0 %v137, 32
  %v146 = vpop.permute.xlu0 %145
  %v147 = vsel %vm38, %v146, 0
  %149 = vmatprep.subr.mxu0 0.0
  %150 = vmatpush1.msra.mxu0 %v32
  %151 = vmatprep.subr.mxu0 0.0
  %152 = vmatpush1.msra.mxu0 %v33
  %153 = vmatprep.subr.mxu0 0.0
  %154 = vmatpush1.msra.mxu0 %v34
  %155 = vmatprep.subr.mxu0 0.0
  %156 = vmatpush1.msra.mxu0 %v35
  %157 = vmatprep.subr.mxu0 0.0
  %158 = vmatpush1.msra.mxu0 0.0
  %159 = vmatprep.subr.mxu0 0.0
  %160 = vmatpush1.msra.mxu0 0.0
  %161 = vmatprep.subr.mxu0 0.0
  %162 = vmatpush1.msra.mxu0 0.0
  %163 = vmatprep.subr.mxu0 0.0
  %164 = vmatpush1.msra.mxu0 0.0
  %165 = vmatprep.subr.mxu0 0.0
  %166 = vmatpush1.msra.mxu0 0.0
  %167 = vmatprep.subr.mxu0 0.0
  %168 = vmatpush1.msra.mxu0 0.0
  %169 = vmatprep.subr.mxu0 0.0
  %170 = vmatpush1.msra.mxu0 0.0
  %171 = vmatprep.subr.mxu0 0.0
  %172 = vmatpush1.msra.mxu0 0.0
  %173 = vmatprep.subr.mxu0 0.0
  %174 = vmatpush1.msra.mxu0 0.0
  %175 = vmatprep.subr.mxu0 0.0
  %176 = vmatpush1.msra.mxu0 0.0
  %177 = vmatprep.subr.mxu0 0.0
  %178 = vmatpush1.msra.mxu0 0.0
  %179 = vmatprep.subr.mxu0 0.0
  %180 = vmatpush1.msra.mxu0 0.0
  %181 = vmatprep.subr.mxu0 0.0
  %182 = vmatpush1.msra.mxu0 0.0
  %183 = vmatprep.subr.mxu0 0.0
  %184 = vmatpush1.msra.mxu0 0.0
  %185 = vmatprep.subr.mxu0 0.0
  %186 = vmatpush1.msra.mxu0 0.0
  %187 = vmatprep.subr.mxu0 0.0
  %188 = vmatpush1.msra.mxu0 0.0
  %189 = vmatprep.subr.mxu0 0.0
  %190 = vmatpush1.msra.mxu0 0.0
  %191 = vmatprep.subr.mxu0 0.0
  %192 = vmatpush1.msra.mxu0 0.0
  %193 = vmatprep.subr.mxu0 0.0
  %194 = vmatpush1.msra.mxu0 0.0
  %195 = vmatprep.subr.mxu0 0.0
  %196 = vmatpush1.msra.mxu0 0.0
  %197 = vmatprep.subr.mxu0 0.0
  %198 = vmatpush1.msra.mxu0 0.0
  %199 = vmatprep.subr.mxu0 0.0
  %200 = vmatpush1.msra.mxu0 0.0
  %201 = vmatprep.subr.mxu0 0.0
  %202 = vmatpush1.msra.mxu0 0.0
  %203 = vmatprep.subr.mxu0 0.0
  %204 = vmatpush1.msra.mxu0 0.0
  %205 = vmatprep.subr.mxu0 0.0
  %206 = vmatpush1.msra.mxu0 0.0
  %207 = vmatprep.subr.mxu0 0.0
  %208 = vmatpush1.msra.mxu0 0.0
  %209 = vmatprep.subr.mxu0 0.0
  %210 = vmatpush1.msra.mxu0 0.0
  %211 = vmatprep.subr.mxu0 0.0
  %212 = vmatpush1.msra.mxu0 0.0
  %213 = vmatprep.mubr.f32.mxu0 0.0
  %214 = vmatmul.mubr.f32.gmra.mrb[0].mxu0 %v147
  %v215 = vpop.f32.mrb[0].mxu0
  %v216 = vadd.f32 %v142, %v215
  %v217 = vpop.f32.mrb[0].mxu0
  %218 = vdwg.mxu0
  %219 = vst [vmem:[#allocation2] sm:$0xff] %v216
  %s220 = scalar_lea.vmem %s0, 8
  %v221 = vld [vmem:[%s220] sm:$0xff]
  %222 = vmatprep.subr.mxu0 0.0
  %223 = vmatpush1.msra.mxu0 %v28
  %224 = vmatprep.subr.mxu0 0.0
  %225 = vmatpush1.msra.mxu0 %v29
  %226 = vmatprep.subr.mxu0 0.0
  %227 = vmatpush1.msra.mxu0 %v30
  %228 = vmatprep.subr.mxu0 0.0
  %229 = vmatpush1.msra.mxu0 %v31
  %230 = vmatprep.subr.mxu0 0.0
  %231 = vmatpush1.msra.mxu0 0.0
  %232 = vmatprep.subr.mxu0 0.0
  %233 = vmatpush1.msra.mxu0 0.0
  %234 = vmatprep.subr.mxu0 0.0
  %235 = vmatpush1.msra.mxu0 0.0
  %236 = vmatprep.subr.mxu0 0.0
  %237 = vmatpush1.msra.mxu0 0.0
  %238 = vmatprep.subr.mxu0 0.0
  %239 = vmatpush1.msra.mxu0 0.0
  %240 = vmatprep.subr.mxu0 0.0
  %241 = vmatpush1.msra.mxu0 0.0
  %242 = vmatprep.subr.mxu0 0.0
  %243 = vmatpush1.msra.mxu0 0.0
  %244 = vmatprep.subr.mxu0 0.0
  %245 = vmatpush1.msra.mxu0 0.0
  %246 = vmatprep.subr.mxu0 0.0
  %247 = vmatpush1.msra.mxu0 0.0
  %248 = vmatprep.subr.mxu0 0.0
  %249 = vmatpush1.msra.mxu0 0.0
  %250 = vmatprep.subr.mxu0 0.0
  %251 = vmatpush1.msra.mxu0 0.0
  %252 = vmatprep.subr.mxu0 0.0
  %253 = vmatpush1.msra.mxu0 0.0
  %254 = vmatprep.subr.mxu0 0.0
  %255 = vmatpush1.msra.mxu0 0.0
  %256 = vmatprep.subr.mxu0 0.0
  %257 = vmatpush1.msra.mxu0 0.0
  %258 = vmatprep.subr.mxu0 0.0
  %259 = vmatpush1.msra.mxu0 0.0
  %260 = vmatprep.subr.mxu0 0.0
  %261 = vmatpush1.msra.mxu0 0.0
  %262 = vmatprep.subr.mxu0 0.0
  %263 = vmatpush1.msra.mxu0 0.0
  %264 = vmatprep.subr.mxu0 0.0
  %265 = vmatpush1.msra.mxu0 0.0
  %266 = vmatprep.subr.mxu0 0.0
  %267 = vmatpush1.msra.mxu0 0.0
  %268 = vmatprep.subr.mxu0 0.0
  %269 = vmatpush1.msra.mxu0 0.0
  %270 = vmatprep.subr.mxu0 0.0
  %271 = vmatpush1.msra.mxu0 0.0
  %272 = vmatprep.subr.mxu0 0.0
  %273 = vmatpush1.msra.mxu0 0.0
  %274 = vmatprep.subr.mxu0 0.0
  %275 = vmatpush1.msra.mxu0 0.0
  %276 = vmatprep.subr.mxu0 0.0
  %277 = vmatpush1.msra.mxu0 0.0
  %278 = vmatprep.subr.mxu0 0.0
  %279 = vmatpush1.msra.mxu0 0.0
  %280 = vmatprep.subr.mxu0 0.0
  %281 = vmatpush1.msra.mxu0 0.0
  %282 = vmatprep.subr.mxu0 0.0
  %283 = vmatpush1.msra.mxu0 0.0
  %284 = vmatprep.subr.mxu0 0.0
  %285 = vmatpush1.msra.mxu0 0.0
  %286 = vmatprep.mubr.f32.mxu0 0.0
  %287 = vmatmul.mubr.f32.gmra.mrb[0].mxu0 %v147
  %v288 = vpop.f32.mrb[0].mxu0
  %v289 = vadd.f32 0.0, %v288
  %v290 = vpop.f32.mrb[0].mxu0
  %291 = vdwg.mxu0
  %v292 = vadd.f32 %v221, %v289
  %v293 = vtanh.pop %v292
  %v294 = vxor.u32 %v292, 2147483648
  %v295 = vmul.f32 %v294, 1.442695
  %v296 = vpow.pop %v295
  %v297 = vadd.f32 %v296, 1.0
  %v298 = vrcp.pop %v297
  %v299 = vmul.f32 1.0, %v298
  %v300 = vsel %vm27, %v293, %v299
  %v301 = vmul.f32 %v300, %v131
  %303 = vrot.lane.b32.xlu0 %v300, 64
  %v304 = vpop.permute.xlu0 %303
  %v306 = vmul.f32 %v300, %v304
  %308 = vrot.lane.b32.xlu0 %v306, 32
  %v309 = vpop.permute.xlu0 %308
  %v311 = vadd.f32 %v301, %v309
  %v312 = vtanh.pop %v311
  %314 = vrot.lane.b32.xlu0 %v312, 64
  %v315 = vpop.permute.xlu0 %314
  %v317 = vmul.f32 %v300, %v315
  %319 = vrot.lane.b32.xlu0 %v317, 32
  %v320 = vpop.permute.xlu0 %319
  %v321 = vsel %vm38, %v320, 0
  %323 = vmatprep.subr.mxu0 0.0
  %324 = vmatpush1.msra.mxu0 %v32
  %325 = vmatprep.subr.mxu0 0.0
  %326 = vmatpush1.msra.mxu0 %v33
  %327 = vmatprep.subr.mxu0 0.0
  %328 = vmatpush1.msra.mxu0 %v34
  %329 = vmatprep.subr.mxu0 0.0
  %330 = vmatpush1.msra.mxu0 %v35
  %331 = vmatprep.subr.mxu0 0.0
  %332 = vmatpush1.msra.mxu0 0.0
  %333 = vmatprep.subr.mxu0 0.0
  %334 = vmatpush1.msra.mxu0 0.0
  %335 = vmatprep.subr.mxu0 0.0
  %336 = vmatpush1.msra.mxu0 0.0
  %337 = vmatprep.subr.mxu0 0.0
  %338 = vmatpush1.msra.mxu0 0.0
  %339 = vmatprep.subr.mxu0 0.0
  %340 = vmatpush1.msra.mxu0 0.0
  %341 = vmatprep.subr.mxu0 0.0
  %342 = vmatpush1.msra.mxu0 0.0
  %343 = vmatprep.subr.mxu0 0.0
  %344 = vmatpush1.msra.mxu0 0.0
  %345 = vmatprep.subr.mxu0 0.0
  %346 = vmatpush1.msra.mxu0 0.0
  %347 = vmatprep.subr.mxu0 0.0
  %348 = vmatpush1.msra.mxu0 0.0
  %349 = vmatprep.subr.mxu0 0.0
  %350 = vmatpush1.msra.mxu0 0.0
  %351 = vmatprep.subr.mxu0 0.0
  %352 = vmatpush1.msra.mxu0 0.0
  %353 = vmatprep.subr.mxu0 0.0
  %354 = vmatpush1.msra.mxu0 0.0
  %355 = vmatprep.subr.mxu0 0.0
  %356 = vmatpush1.msra.mxu0 0.0
  %357 = vmatprep.subr.mxu0 0.0
  %358 = vmatpush1.msra.mxu0 0.0
  %359 = vmatprep.subr.mxu0 0.0
  %360 = vmatpush1.msra.mxu0 0.0
  %361 = vmatprep.subr.mxu0 0.0
  %362 = vmatpush1.msra.mxu0 0.0
  %363 = vmatprep.subr.mxu0 0.0
  %364 = vmatpush1.msra.mxu0 0.0
  %365 = vmatprep.subr.mxu0 0.0
  %366 = vmatpush1.msra.mxu0 0.0
  %367 = vmatprep.subr.mxu0 0.0
  %368 = vmatpush1.msra.mxu0 0.0
  %369 = vmatprep.subr.mxu0 0.0
  %370 = vmatpush1.msra.mxu0 0.0
  %371 = vmatprep.subr.mxu0 0.0
  %372 = vmatpush1.msra.mxu0 0.0
  %373 = vmatprep.subr.mxu0 0.0
  %374 = vmatpush1.msra.mxu0 0.0
  %375 = vmatprep.subr.mxu0 0.0
  %376 = vmatpush1.msra.mxu0 0.0
  %377 = vmatprep.subr.mxu0 0.0
  %378 = vmatpush1.msra.mxu0 0.0
  %379 = vmatprep.subr.mxu0 0.0
  %380 = vmatpush1.msra.mxu0 0.0
  %381 = vmatprep.subr.mxu0 0.0
  %382 = vmatpush1.msra.mxu0 0.0
  %383 = vmatprep.subr.mxu0 0.0
  %384 = vmatpush1.msra.mxu0 0.0
  %385 = vmatprep.subr.mxu0 0.0
  %386 = vmatpush1.msra.mxu0 0.0
  %387 = vmatprep.mubr.f32.mxu0 0.0
  %388 = vmatmul.mubr.f32.gmra.mrb[0].mxu0 %v321
  %v389 = vpop.f32.mrb[0].mxu0
  %v390 = vadd.f32 %v142, %v389
  %v391 = vpop.f32.mrb[0].mxu0
  %392 = vdwg.mxu0
  %s393 = scalar_lea.vmem [#allocation2], 8
  %394 = vst [vmem:[%s393] sm:$0xff] %v390
  %s395 = scalar_lea.vmem %s0, 16
  %v396 = vld [vmem:[%s395] sm:$0xff]
  %397 = vmatprep.subr.mxu0 0.0
  %398 = vmatpush1.msra.mxu0 %v28
  %399 = vmatprep.subr.mxu0 0.0
  %400 = vmatpush1.msra.mxu0 %v29
  %401 = vmatprep.subr.mxu0 0.0
  %402 = vmatpush1.msra.mxu0 %v30
  %403 = vmatprep.subr.mxu0 0.0
  %404 = vmatpush1.msra.mxu0 %v31
  %405 = vmatprep.subr.mxu0 0.0
  %406 = vmatpush1.msra.mxu0 0.0
  %407 = vmatprep.subr.mxu0 0.0
  %408 = vmatpush1.msra.mxu0 0.0
  %409 = vmatprep.subr.mxu0 0.0
  %410 = vmatpush1.msra.mxu0 0.0
  %411 = vmatprep.subr.mxu0 0.0
  %412 = vmatpush1.msra.mxu0 0.0
  %413 = vmatprep.subr.mxu0 0.0
  %414 = vmatpush1.msra.mxu0 0.0
  %415 = vmatprep.subr.mxu0 0.0
  %416 = vmatpush1.msra.mxu0 0.0
  %417 = vmatprep.subr.mxu0 0.0
  %418 = vmatpush1.msra.mxu0 0.0
  %419 = vmatprep.subr.mxu0 0.0
  %420 = vmatpush1.msra.mxu0 0.0
  %421 = vmatprep.subr.mxu0 0.0
  %422 = vmatpush1.msra.mxu0 0.0
  %423 = vmatprep.subr.mxu0 0.0
  %424 = vmatpush1.msra.mxu0 0.0
  %425 = vmatprep.subr.mxu0 0.0
  %426 = vmatpush1.msra.mxu0 0.0
  %427 = vmatprep.subr.mxu0 0.0
  %428 = vmatpush1.msra.mxu0 0.0
  %429 = vmatprep.subr.mxu0 0.0
  %430 = vmatpush1.msra.mxu0 0.0
  %431 = vmatprep.subr.mxu0 0.0
  %432 = vmatpush1.msra.mxu0 0.0
  %433 = vmatprep.subr.mxu0 0.0
  %434 = vmatpush1.msra.mxu0 0.0
  %435 = vmatprep.subr.mxu0 0.0
  %436 = vmatpush1.msra.mxu0 0.0
  %437 = vmatprep.subr.mxu0 0.0
  %438 = vmatpush1.msra.mxu0 0.0
  %439 = vmatprep.subr.mxu0 0.0
  %440 = vmatpush1.msra.mxu0 0.0
  %441 = vmatprep.subr.mxu0 0.0
  %442 = vmatpush1.msra.mxu0 0.0
  %443 = vmatprep.subr.mxu0 0.0
  %444 = vmatpush1.msra.mxu0 0.0
  %445 = vmatprep.subr.mxu0 0.0
  %446 = vmatpush1.msra.mxu0 0.0
  %447 = vmatprep.subr.mxu0 0.0
  %448 = vmatpush1.msra.mxu0 0.0
  %449 = vmatprep.subr.mxu0 0.0
  %450 = vmatpush1.msra.mxu0 0.0
  %451 = vmatprep.subr.mxu0 0.0
  %452 = vmatpush1.msra.mxu0 0.0
  %453 = vmatprep.subr.mxu0 0.0
  %454 = vmatpush1.msra.mxu0 0.0
  %455 = vmatprep.subr.mxu0 0.0
  %456 = vmatpush1.msra.mxu0 0.0
  %457 = vmatprep.subr.mxu0 0.0
  %458 = vmatpush1.msra.mxu0 0.0
  %459 = vmatprep.subr.mxu0 0.0
  %460 = vmatpush1.msra.mxu0 0.0
  %461 = vmatprep.mubr.f32.mxu0 0.0
  %462 = vmatmul.mubr.f32.gmra.mrb[0].mxu0 %v321
  %v463 = vpop.f32.mrb[0].mxu0
  %v464 = vadd.f32 0.0, %v463
  %v465 = vpop.f32.mrb[0].mxu0
  %466 = vdwg.mxu0
  %v467 = vadd.f32 %v396, %v464
  %v468 = vtanh.pop %v467
  %v469 = vxor.u32 %v467, 2147483648
  %v470 = vmul.f32 %v469, 1.442695
  %v471 = vpow.pop %v470
  %v472 = vadd.f32 %v471, 1.0
  %v473 = vrcp.pop %v472
  %v474 = vmul.f32 1.0, %v473
  %v475 = vsel %vm27, %v468, %v474
  %v476 = vmul.f32 %v475, %v311
  %478 = vrot.lane.b32.xlu0 %v475, 64
  %v479 = vpop.permute.xlu0 %478
  %v481 = vmul.f32 %v475, %v479
  %483 = vrot.lane.b32.xlu0 %v481, 32
  %v484 = vpop.permute.xlu0 %483
  %v486 = vadd.f32 %v476, %v484
  %v487 = vtanh.pop %v486
  %489 = vrot.lane.b32.xlu0 %v487, 64
  %v490 = vpop.permute.xlu0 %489
  %v492 = vmul.f32 %v475, %v490
  %494 = vrot.lane.b32.xlu0 %v492, 32
  %v495 = vpop.permute.xlu0 %494
  %v496 = vsel %vm38, %v495, 0
  %498 = vmatprep.subr.mxu0 0.0
  %499 = vmatpush1.msra.mxu0 %v32
  %500 = vmatprep.subr.mxu0 0.0
  %501 = vmatpush1.msra.mxu0 %v33
  %502 = vmatprep.subr.mxu0 0.0
  %503 = vmatpush1.msra.mxu0 %v34
  %504 = vmatprep.subr.mxu0 0.0
  %505 = vmatpush1.msra.mxu0 %v35
  %506 = vmatprep.subr.mxu0 0.0
  %507 = vmatpush1.msra.mxu0 0.0
  %508 = vmatprep.subr.mxu0 0.0
  %509 = vmatpush1.msra.mxu0 0.0
  %510 = vmatprep.subr.mxu0 0.0
  %511 = vmatpush1.msra.mxu0 0.0
  %512 = vmatprep.subr.mxu0 0.0
  %513 = vmatpush1.msra.mxu0 0.0
  %514 = vmatprep.subr.mxu0 0.0
  %515 = vmatpush1.msra.mxu0 0.0
  %516 = vmatprep.subr.mxu0 0.0
  %517 = vmatpush1.msra.mxu0 0.0
  %518 = vmatprep.subr.mxu0 0.0
  %519 = vmatpush1.msra.mxu0 0.0
  %520 = vmatprep.subr.mxu0 0.0
  %521 = vmatpush1.msra.mxu0 0.0
  %522 = vmatprep.subr.mxu0 0.0
  %523 = vmatpush1.msra.mxu0 0.0
  %524 = vmatprep.subr.mxu0 0.0
  %525 = vmatpush1.msra.mxu0 0.0
  %526 = vmatprep.subr.mxu0 0.0
  %527 = vmatpush1.msra.mxu0 0.0
  %528 = vmatprep.subr.mxu0 0.0
  %529 = vmatpush1.msra.mxu0 0.0
  %530 = vmatprep.subr.mxu0 0.0
  %531 = vmatpush1.msra.mxu0 0.0
  %532 = vmatprep.subr.mxu0 0.0
  %533 = vmatpush1.msra.mxu0 0.0
  %534 = vmatprep.subr.mxu0 0.0
  %535 = vmatpush1.msra.mxu0 0.0
  %536 = vmatprep.subr.mxu0 0.0
  %537 = vmatpush1.msra.mxu0 0.0
  %538 = vmatprep.subr.mxu0 0.0
  %539 = vmatpush1.msra.mxu0 0.0
  %540 = vmatprep.subr.mxu0 0.0
  %541 = vmatpush1.msra.mxu0 0.0
  %542 = vmatprep.subr.mxu0 0.0
  %543 = vmatpush1.msra.mxu0 0.0
  %544 = vmatprep.subr.mxu0 0.0
  %545 = vmatpush1.msra.mxu0 0.0
  %546 = vmatprep.subr.mxu0 0.0
  %547 = vmatpush1.msra.mxu0 0.0
  %548 = vmatprep.subr.mxu0 0.0
  %549 = vmatpush1.msra.mxu0 0.0
  %550 = vmatprep.subr.mxu0 0.0
  %551 = vmatpush1.msra.mxu0 0.0
  %552 = vmatprep.subr.mxu0 0.0
  %553 = vmatpush1.msra.mxu0 0.0
  %554 = vmatprep.subr.mxu0 0.0
  %555 = vmatpush1.msra.mxu0 0.0
  %556 = vmatprep.subr.mxu0 0.0
  %557 = vmatpush1.msra.mxu0 0.0
  %558 = vmatprep.subr.mxu0 0.0
  %559 = vmatpush1.msra.mxu0 0.0
  %560 = vmatprep.subr.mxu0 0.0
  %561 = vmatpush1.msra.mxu0 0.0
  %562 = vmatprep.mubr.f32.mxu0 0.0
  %563 = vmatmul.mubr.f32.gmra.mrb[0].mxu0 %v496
  %v564 = vpop.f32.mrb[0].mxu0
  %v565 = vadd.f32 %v142, %v564
  %v566 = vpop.f32.mrb[0].mxu0
  %567 = vdwg.mxu0
  %s568 = scalar_lea.vmem [#allocation2], 16
  %569 = vst [vmem:[%s568] sm:$0xff] %v565
  %s570 = scalar_lea.vmem %s0, 24
  %v571 = vld [vmem:[%s570] sm:$0xff]
  %572 = vmatprep.subr.mxu0 0.0
  %573 = vmatpush1.msra.mxu0 %v28
  %574 = vmatprep.subr.mxu0 0.0
  %575 = vmatpush1.msra.mxu0 %v29
  %576 = vmatprep.subr.mxu0 0.0
  %577 = vmatpush1.msra.mxu0 %v30
  %578 = vmatprep.subr.mxu0 0.0
  %579 = vmatpush1.msra.mxu0 %v31
  %580 = vmatprep.subr.mxu0 0.0
  %581 = vmatpush1.msra.mxu0 0.0
  %582 = vmatprep.subr.mxu0 0.0
  %583 = vmatpush1.msra.mxu0 0.0
  %584 = vmatprep.subr.mxu0 0.0
  %585 = vmatpush1.msra.mxu0 0.0
  %586 = vmatprep.subr.mxu0 0.0
  %587 = vmatpush1.msra.mxu0 0.0
  %588 = vmatprep.subr.mxu0 0.0
  %589 = vmatpush1.msra.mxu0 0.0
  %590 = vmatprep.subr.mxu0 0.0
  %591 = vmatpush1.msra.mxu0 0.0
  %592 = vmatprep.subr.mxu0 0.0
  %593 = vmatpush1.msra.mxu0 0.0
  %594 = vmatprep.subr.mxu0 0.0
  %595 = vmatpush1.msra.mxu0 0.0
  %596 = vmatprep.subr.mxu0 0.0
  %597 = vmatpush1.msra.mxu0 0.0
  %598 = vmatprep.subr.mxu0 0.0
  %599 = vmatpush1.msra.mxu0 0.0
  %600 = vmatprep.subr.mxu0 0.0
  %601 = vmatpush1.msra.mxu0 0.0
  %602 = vmatprep.subr.mxu0 0.0
  %603 = vmatpush1.msra.mxu0 0.0
  %604 = vmatprep.subr.mxu0 0.0
  %605 = vmatpush1.msra.mxu0 0.0
  %606 = vmatprep.subr.mxu0 0.0
  %607 = vmatpush1.msra.mxu0 0.0
  %608 = vmatprep.subr.mxu0 0.0
  %609 = vmatpush1.msra.mxu0 0.0
  %610 = vmatprep.subr.mxu0 0.0
  %611 = vmatpush1.msra.mxu0 0.0
  %612 = vmatprep.subr.mxu0 0.0
  %613 = vmatpush1.msra.mxu0 0.0
  %614 = vmatprep.subr.mxu0 0.0
  %615 = vmatpush1.msra.mxu0 0.0
  %616 = vmatprep.subr.mxu0 0.0
  %617 = vmatpush1.msra.mxu0 0.0
  %618 = vmatprep.subr.mxu0 0.0
  %619 = vmatpush1.msra.mxu0 0.0
  %620 = vmatprep.subr.mxu0 0.0
  %621 = vmatpush1.msra.mxu0 0.0
  %622 = vmatprep.subr.mxu0 0.0
  %623 = vmatpush1.msra.mxu0 0.0
  %624 = vmatprep.subr.mxu0 0.0
  %625 = vmatpush1.msra.mxu0 0.0
  %626 = vmatprep.subr.mxu0 0.0
  %627 = vmatpush1.msra.mxu0 0.0
  %628 = vmatprep.subr.mxu0 0.0
  %629 = vmatpush1.msra.mxu0 0.0
  %630 = vmatprep.subr.mxu0 0.0
  %631 = vmatpush1.msra.mxu0 0.0
  %632 = vmatprep.subr.mxu0 0.0
  %633 = vmatpush1.msra.mxu0 0.0
  %634 = vmatprep.subr.mxu0 0.0
  %635 = vmatpush1.msra.mxu0 0.0
  %636 = vmatprep.mubr.f32.mxu0 0.0
  %637 = vmatmul.mubr.f32.gmra.mrb[0].mxu0 %v496
  %v638 = vpop.f32.mrb[0].mxu0
  %v639 = vadd.f32 0.0, %v638
  %v640 = vpop.f32.mrb[0].mxu0
  %641 = vdwg.mxu0
  %v642 = vadd.f32 %v571, %v639
  %v643 = vtanh.pop %v642
  %v644 = vxor.u32 %v642, 2147483648
  %v645 = vmul.f32 %v644, 1.442695
  %v646 = vpow.pop %v645
  %v647 = vadd.f32 %v646, 1.0
  %v648 = vrcp.pop %v647
  %v649 = vmul.f32 1.0, %v648
  %v650 = vsel %vm27, %v643, %v649
  %v651 = vmul.f32 %v650, %v486
  %653 = vrot.lane.b32.xlu0 %v650, 64
  %v654 = vpop.permute.xlu0 %653
  %v656 = vmul.f32 %v650, %v654
  %658 = vrot.lane.b32.xlu0 %v656, 32
  %v659 = vpop.permute.xlu0 %658
  %v661 = vadd.f32 %v651, %v659
  %v662 = vtanh.pop %v661
  %664 = vrot.lane.b32.xlu0 %v662, 64
  %v665 = vpop.permute.xlu0 %664
  %v667 = vmul.f32 %v650, %v665
  %669 = vrot.lane.b32.xlu0 %v667, 32
  %v670 = vpop.permute.xlu0 %669
  %v671 = vsel %vm38, %v670, 0
  %673 = vmatprep.subr.mxu0 0.0
  %674 = vmatpush1.msra.mxu0 %v32
  %675 = vmatprep.subr.mxu0 0.0
  %676 = vmatpush1.msra.mxu0 %v33
  %677 = vmatprep.subr.mxu0 0.0
  %678 = vmatpush1.msra.mxu0 %v34
  %679 = vmatprep.subr.mxu0 0.0
  %680 = vmatpush1.msra.mxu0 %v35
  %681 = vmatprep.subr.mxu0 0.0
  %682 = vmatpush1.msra.mxu0 0.0
  %683 = vmatprep.subr.mxu0 0.0
  %684 = vmatpush1.msra.mxu0 0.0
  %685 = vmatprep.subr.mxu0 0.0
  %686 = vmatpush1.msra.mxu0 0.0
  %687 = vmatprep.subr.mxu0 0.0
  %688 = vmatpush1.msra.mxu0 0.0
  %689 = vmatprep.subr.mxu0 0.0
  %690 = vmatpush1.msra.mxu0 0.0
  %691 = vmatprep.subr.mxu0 0.0
  %692 = vmatpush1.msra.mxu0 0.0
  %693 = vmatprep.subr.mxu0 0.0
  %694 = vmatpush1.msra.mxu0 0.0
  %695 = vmatprep.subr.mxu0 0.0
  %696 = vmatpush1.msra.mxu0 0.0
  %697 = vmatprep.subr.mxu0 0.0
  %698 = vmatpush1.msra.mxu0 0.0
  %699 = vmatprep.subr.mxu0 0.0
  %700 = vmatpush1.msra.mxu0 0.0
  %701 = vmatprep.subr.mxu0 0.0
  %702 = vmatpush1.msra.mxu0 0.0
  %703 = vmatprep.subr.mxu0 0.0
  %704 = vmatpush1.msra.mxu0 0.0
  %705 = vmatprep.subr.mxu0 0.0
  %706 = vmatpush1.msra.mxu0 0.0
  %707 = vmatprep.subr.mxu0 0.0
  %708 = vmatpush1.msra.mxu0 0.0
  %709 = vmatprep.subr.mxu0 0.0
  %710 = vmatpush1.msra.mxu0 0.0
  %711 = vmatprep.subr.mxu0 0.0
  %712 = vmatpush1.msra.mxu0 0.0
  %713 = vmatprep.subr.mxu0 0.0
  %714 = vmatpush1.msra.mxu0 0.0
  %715 = vmatprep.subr.mxu0 0.0
  %716 = vmatpush1.msra.mxu0 0.0
  %717 = vmatprep.subr.mxu0 0.0
  %718 = vmatpush1.msra.mxu0 0.0
  %719 = vmatprep.subr.mxu0 0.0
  %720 = vmatpush1.msra.mxu0 0.0
  %721 = vmatprep.subr.mxu0 0.0
  %722 = vmatpush1.msra.mxu0 0.0
  %723 = vmatprep.subr.mxu0 0.0
  %724 = vmatpush1.msra.mxu0 0.0
  %725 = vmatprep.subr.mxu0 0.0
  %726 = vmatpush1.msra.mxu0 0.0
  %727 = vmatprep.subr.mxu0 0.0
  %728 = vmatpush1.msra.mxu0 0.0
  %729 = vmatprep.subr.mxu0 0.0
  %730 = vmatpush1.msra.mxu0 0.0
  %731 = vmatprep.subr.mxu0 0.0
  %732 = vmatpush1.msra.mxu0 0.0
  %733 = vmatprep.subr.mxu0 0.0
  %734 = vmatpush1.msra.mxu0 0.0
  %735 = vmatprep.subr.mxu0 0.0
  %736 = vmatpush1.msra.mxu0 0.0
  %737 = vmatprep.mubr.f32.mxu0 0.0
  %738 = vmatmul.mubr.f32.gmra.mrb[0].mxu0 %v671
  %v739 = vpop.f32.mrb[0].mxu0
  %v740 = vadd.f32 %v142, %v739
  %v741 = vpop.f32.mrb[0].mxu0
  %742 = vdwg.mxu0
  %s743 = scalar_lea.vmem [#allocation2], 24
  %744 = vst [vmem:[%s743] sm:$0xff] %v740
  %s745 = scalar_lea.vmem %s0, 32
  %v746 = vld [vmem:[%s745] sm:$0xff]
  %747 = vmatprep.subr.mxu0 0.0
  %748 = vmatpush1.msra.mxu0 %v28
  %749 = vmatprep.subr.mxu0 0.0
  %750 = vmatpush1.msra.mxu0 %v29
  %751 = vmatprep.subr.mxu0 0.0
  %752 = vmatpush1.msra.mxu0 %v30
  %753 = vmatprep.subr.mxu0 0.0
  %754 = vmatpush1.msra.mxu0 %v31
  %755 = vmatprep.subr.mxu0 0.0
  %756 = vmatpush1.msra.mxu0 0.0
  %757 = vmatprep.subr.mxu0 0.0
  %758 = vmatpush1.msra.mxu0 0.0
  %759 = vmatprep.subr.mxu0 0.0
  %760 = vmatpush1.msra.mxu0 0.0
  %761 = vmatprep.subr.mxu0 0.0
  %762 = vmatpush1.msra.mxu0 0.0
  %763 = vmatprep.subr.mxu0 0.0
  %764 = vmatpush1.msra.mxu0 0.0
  %765 = vmatprep.subr.mxu0 0.0
  %766 = vmatpush1.msra.mxu0 0.0
  %767 = vmatprep.subr.mxu0 0.0
  %768 = vmatpush1.msra.mxu0 0.0
  %769 = vmatprep.subr.mxu0 0.0
  %770 = vmatpush1.msra.mxu0 0.0
  %771 = vmatprep.subr.mxu0 0.0
  %772 = vmatpush1.msra.mxu0 0.0
  %773 = vmatprep.subr.mxu0 0.0
  %774 = vmatpush1.msra.mxu0 0.0
  %775 = vmatprep.subr.mxu0 0.0
  %776 = vmatpush1.msra.mxu0 0.0
  %777 = vmatprep.subr.mxu0 0.0
  %778 = vmatpush1.msra.mxu0 0.0
  %779 = vmatprep.subr.mxu0 0.0
  %780 = vmatpush1.msra.mxu0 0.0
  %781 = vmatprep.subr.mxu0 0.0
  %782 = vmatpush1.msra.mxu0 0.0
  %783 = vmatprep.subr.mxu0 0.0
  %784 = vmatpush1.msra.mxu0 0.0
  %785 = vmatprep.subr.mxu0 0.0
  %786 = vmatpush1.msra.mxu0 0.0
  %787 = vmatprep.subr.mxu0 0.0
  %788 = vmatpush1.msra.mxu0 0.0
  %789 = vmatprep.subr.mxu0 0.0
  %790 = vmatpush1.msra.mxu0 0.0
  %791 = vmatprep.subr.mxu0 0.0
  %792 = vmatpush1.msra.mxu0 0.0
  %793 = vmatprep.subr.mxu0 0.0
  %794 = vmatpush1.msra.mxu0 0.0
  %795 = vmatprep.subr.mxu0 0.0
  %796 = vmatpush1.msra.mxu0 0.0
  %797 = vmatprep.subr.mxu0 0.0
  %798 = vmatpush1.msra.mxu0 0.0
  %799 = vmatprep.subr.mxu0 0.0
  %800 = vmatpush1.msra.mxu0 0.0
  %801 = vmatprep.subr.mxu0 0.0
  %802 = vmatpush1.msra.mxu0 0.0
  %803 = vmatprep.subr.mxu0 0.0
  %804 = vmatpush1.msra.mxu0 0.0
  %805 = vmatprep.subr.mxu0 0.0
  %806 = vmatpush1.msra.mxu0 0.0
  %807 = vmatprep.subr.mxu0 0.0
  %808 = vmatpush1.msra.mxu0 0.0
  %809 = vmatprep.subr.mxu0 0.0
  %810 = vmatpush1.msra.mxu0 0.0
  %811 = vmatprep.mubr.f32.mxu0 0.0
  %812 = vmatmul.mubr.f32.gmra.mrb[0].mxu0 %v671
  %v813 = vpop.f32.mrb[0].mxu0
  %v814 = vadd.f32 0.0, %v813
  %v815 = vpop.f32.mrb[0].mxu0
  %816 = vdwg.mxu0
  %v817 = vadd.f32 %v746, %v814
  %v818 = vtanh.pop %v817
  %v819 = vxor.u32 %v817, 2147483648
  %v820 = vmul.f32 %v819, 1.442695
  %v821 = vpow.pop %v820
  %v822 = vadd.f32 %v821, 1.0
  %v823 = vrcp.pop %v822
  %v824 = vmul.f32 1.0, %v823
  %v825 = vsel %vm27, %v818, %v824
  %v826 = vmul.f32 %v825, %v661
  %828 = vrot.lane.b32.xlu0 %v825, 64
  %v829 = vpop.permute.xlu0 %828
  %v831 = vmul.f32 %v825, %v829
  %833 = vrot.lane.b32.xlu0 %v831, 32
  %v834 = vpop.permute.xlu0 %833
  %v836 = vadd.f32 %v826, %v834
  %v837 = vtanh.pop %v836
  %839 = vrot.lane.b32.xlu0 %v837, 64
  %v840 = vpop.permute.xlu0 %839
  %v842 = vmul.f32 %v825, %v840
  %844 = vrot.lane.b32.xlu0 %v842, 32
  %v845 = vpop.permute.xlu0 %844
  %v846 = vsel %vm38, %v845, 0
  %848 = vmatprep.subr.mxu0 0.0
  %849 = vmatpush1.msra.mxu0 %v32
  %850 = vmatprep.subr.mxu0 0.0
  %851 = vmatpush1.msra.mxu0 %v33
  %852 = vmatprep.subr.mxu0 0.0
  %853 = vmatpush1.msra.mxu0 %v34
  %854 = vmatprep.subr.mxu0 0.0
  %855 = vmatpush1.msra.mxu0 %v35
  %856 = vmatprep.subr.mxu0 0.0
  %857 = vmatpush1.msra.mxu0 0.0
  %858 = vmatprep.subr.mxu0 0.0
  %859 = vmatpush1.msra.mxu0 0.0
  %860 = vmatprep.subr.mxu0 0.0
  %861 = vmatpush1.msra.mxu0 0.0
  %862 = vmatprep.subr.mxu0 0.0
  %863 = vmatpush1.msra.mxu0 0.0
  %864 = vmatprep.subr.mxu0 0.0
  %865 = vmatpush1.msra.mxu0 0.0
  %866 = vmatprep.subr.mxu0 0.0
  %867 = vmatpush1.msra.mxu0 0.0
  %868 = vmatprep.subr.mxu0 0.0
  %869 = vmatpush1.msra.mxu0 0.0
  %870 = vmatprep.subr.mxu0 0.0
  %871 = vmatpush1.msra.mxu0 0.0
  %872 = vmatprep.subr.mxu0 0.0
  %873 = vmatpush1.msra.mxu0 0.0
  %874 = vmatprep.subr.mxu0 0.0
  %875 = vmatpush1.msra.mxu0 0.0
  %876 = vmatprep.subr.mxu0 0.0
  %877 = vmatpush1.msra.mxu0 0.0
  %878 = vmatprep.subr.mxu0 0.0
  %879 = vmatpush1.msra.mxu0 0.0
  %880 = vmatprep.subr.mxu0 0.0
  %881 = vmatpush1.msra.mxu0 0.0
  %882 = vmatprep.subr.mxu0 0.0
  %883 = vmatpush1.msra.mxu0 0.0
  %884 = vmatprep.subr.mxu0 0.0
  %885 = vmatpush1.msra.mxu0 0.0
  %886 = vmatprep.subr.mxu0 0.0
  %887 = vmatpush1.msra.mxu0 0.0
  %888 = vmatprep.subr.mxu0 0.0
  %889 = vmatpush1.msra.mxu0 0.0
  %890 = vmatprep.subr.mxu0 0.0
  %891 = vmatpush1.msra.mxu0 0.0
  %892 = vmatprep.subr.mxu0 0.0
  %893 = vmatpush1.msra.mxu0 0.0
  %894 = vmatprep.subr.mxu0 0.0
  %895 = vmatpush1.msra.mxu0 0.0
  %896 = vmatprep.subr.mxu0 0.0
  %897 = vmatpush1.msra.mxu0 0.0
  %898 = vmatprep.subr.mxu0 0.0
  %899 = vmatpush1.msra.mxu0 0.0
  %900 = vmatprep.subr.mxu0 0.0
  %901 = vmatpush1.msra.mxu0 0.0
  %902 = vmatprep.subr.mxu0 0.0
  %903 = vmatpush1.msra.mxu0 0.0
  %904 = vmatprep.subr.mxu0 0.0
  %905 = vmatpush1.msra.mxu0 0.0
  %906 = vmatprep.subr.mxu0 0.0
  %907 = vmatpush1.msra.mxu0 0.0
  %908 = vmatprep.subr.mxu0 0.0
  %909 = vmatpush1.msra.mxu0 0.0
  %910 = vmatprep.subr.mxu0 0.0
  %911 = vmatpush1.msra.mxu0 0.0
  %912 = vmatprep.mubr.f32.mxu0 0.0
  %913 = vmatmul.mubr.f32.gmra.mrb[0].mxu0 %v846
  %v914 = vpop.f32.mrb[0].mxu0
  %v915 = vadd.f32 %v142, %v914
  %v916 = vpop.f32.mrb[0].mxu0
  %917 = vdwg.mxu0
  %s918 = scalar_lea.vmem [#allocation2], 32
  %919 = vst [vmem:[%s918] sm:$0xff] %v915
  %s920 = scalar_lea.vmem %s0, 40
  %v921 = vld [vmem:[%s920] sm:$0xff]
  %922 = vmatprep.subr.mxu0 0.0
  %923 = vmatpush1.msra.mxu0 %v28
  %924 = vmatprep.subr.mxu0 0.0
  %925 = vmatpush1.msra.mxu0 %v29
  %926 = vmatprep.subr.mxu0 0.0
  %927 = vmatpush1.msra.mxu0 %v30
  %928 = vmatprep.subr.mxu0 0.0
  %929 = vmatpush1.msra.mxu0 %v31
  %930 = vmatprep.subr.mxu0 0.0
  %931 = vmatpush1.msra.mxu0 0.0
  %932 = vmatprep.subr.mxu0 0.0
  %933 = vmatpush1.msra.mxu0 0.0
  %934 = vmatprep.subr.mxu0 0.0
  %935 = vmatpush1.msra.mxu0 0.0
  %936 = vmatprep.subr.mxu0 0.0
  %937 = vmatpush1.msra.mxu0 0.0
  %938 = vmatprep.subr.mxu0 0.0
  %939 = vmatpush1.msra.mxu0 0.0
  %940 = vmatprep.subr.mxu0 0.0
  %941 = vmatpush1.msra.mxu0 0.0
  %942 = vmatprep.subr.mxu0 0.0
  %943 = vmatpush1.msra.mxu0 0.0
  %944 = vmatprep.subr.mxu0 0.0
  %945 = vmatpush1.msra.mxu0 0.0
  %946 = vmatprep.subr.mxu0 0.0
  %947 = vmatpush1.msra.mxu0 0.0
  %948 = vmatprep.subr.mxu0 0.0
  %949 = vmatpush1.msra.mxu0 0.0
  %950 = vmatprep.subr.mxu0 0.0
  %951 = vmatpush1.msra.mxu0 0.0
  %952 = vmatprep.subr.mxu0 0.0
  %953 = vmatpush1.msra.mxu0 0.0
  %954 = vmatprep.subr.mxu0 0.0
  %955 = vmatpush1.msra.mxu0 0.0
  %956 = vmatprep.subr.mxu0 0.0
  %957 = vmatpush1.msra.mxu0 0.0
  %958 = vmatprep.subr.mxu0 0.0
  %959 = vmatpush1.msra.mxu0 0.0
  %960 = vmatprep.subr.mxu0 0.0
  %961 = vmatpush1.msra.mxu0 0.0
  %962 = vmatprep.subr.mxu0 0.0
  %963 = vmatpush1.msra.mxu0 0.0
  %964 = vmatprep.subr.mxu0 0.0
  %965 = vmatpush1.msra.mxu0 0.0
  %966 = vmatprep.subr.mxu0 0.0
  %967 = vmatpush1.msra.mxu0 0.0
  %968 = vmatprep.subr.mxu0 0.0
  %969 = vmatpush1.msra.mxu0 0.0
  %970 = vmatprep.subr.mxu0 0.0
  %971 = vmatpush1.msra.mxu0 0.0
  %972 = vmatprep.subr.mxu0 0.0
  %973 = vmatpush1.msra.mxu0 0.0
  %974 = vmatprep.subr.mxu0 0.0
  %975 = vmatpush1.msra.mxu0 0.0
  %976 = vmatprep.subr.mxu0 0.0
  %977 = vmatpush1.msra.mxu0 0.0
  %978 = vmatprep.subr.mxu0 0.0
  %979 = vmatpush1.msra.mxu0 0.0
  %980 = vmatprep.subr.mxu0 0.0
  %981 = vmatpush1.msra.mxu0 0.0
  %982 = vmatprep.subr.mxu0 0.0
  %983 = vmatpush1.msra.mxu0 0.0
  %984 = vmatprep.subr.mxu0 0.0
  %985 = vmatpush1.msra.mxu0 0.0
  %986 = vmatprep.mubr.f32.mxu0 0.0
  %987 = vmatmul.mubr.f32.gmra.mrb[0].mxu0 %v846
  %v988 = vpop.f32.mrb[0].mxu0
  %v989 = vadd.f32 0.0, %v988
  %v990 = vpop.f32.mrb[0].mxu0
  %991 = vdwg.mxu0
  %v992 = vadd.f32 %v921, %v989
  %v993 = vtanh.pop %v992
  %v994 = vxor.u32 %v992, 2147483648
  %v995 = vmul.f32 %v994, 1.442695
  %v996 = vpow.pop %v995
  %v997 = vadd.f32 %v996, 1.0
  %v998 = vrcp.pop %v997
  %v999 = vmul.f32 1.0, %v998
  %v1000 = vsel %vm27, %v993, %v999
  %v1001 = vmul.f32 %v1000, %v836
  %1003 = vrot.lane.b32.xlu0 %v1000, 64
  %v1004 = vpop.permute.xlu0 %1003
  %v1006 = vmul.f32 %v1000, %v1004
  %1008 = vrot.lane.b32.xlu0 %v1006, 32
  %v1009 = vpop.permute.xlu0 %1008
  %v1011 = vadd.f32 %v1001, %v1009
  %v1012 = vtanh.pop %v1011
  %1014 = vrot.lane.b32.xlu0 %v1012, 64
  %v1015 = vpop.permute.xlu0 %1014
  %v1017 = vmul.f32 %v1000, %v1015
  %1019 = vrot.lane.b32.xlu0 %v1017, 32
  %v1020 = vpop.permute.xlu0 %1019
  %v1021 = vsel %vm38, %v1020, 0
  %1023 = vmatprep.subr.mxu0 0.0
  %1024 = vmatpush1.msra.mxu0 %v32
  %1025 = vmatprep.subr.mxu0 0.0
  %1026 = vmatpush1.msra.mxu0 %v33
  %1027 = vmatprep.subr.mxu0 0.0
  %1028 = vmatpush1.msra.mxu0 %v34
  %1029 = vmatprep.subr.mxu0 0.0
  %1030 = vmatpush1.msra.mxu0 %v35
  %1031 = vmatprep.subr.mxu0 0.0
  %1032 = vmatpush1.msra.mxu0 0.0
  %1033 = vmatprep.subr.mxu0 0.0
  %1034 = vmatpush1.msra.mxu0 0.0
  %1035 = vmatprep.subr.mxu0 0.0
  %1036 = vmatpush1.msra.mxu0 0.0
  %1037 = vmatprep.subr.mxu0 0.0
  %1038 = vmatpush1.msra.mxu0 0.0
  %1039 = vmatprep.subr.mxu0 0.0
  %1040 = vmatpush1.msra.mxu0 0.0
  %1041 = vmatprep.subr.mxu0 0.0
  %1042 = vmatpush1.msra.mxu0 0.0
  %1043 = vmatprep.subr.mxu0 0.0
  %1044 = vmatpush1.msra.mxu0 0.0
  %1045 = vmatprep.subr.mxu0 0.0
  %1046 = vmatpush1.msra.mxu0 0.0
  %1047 = vmatprep.subr.mxu0 0.0
  %1048 = vmatpush1.msra.mxu0 0.0
  %1049 = vmatprep.subr.mxu0 0.0
  %1050 = vmatpush1.msra.mxu0 0.0
  %1051 = vmatprep.subr.mxu0 0.0
  %1052 = vmatpush1.msra.mxu0 0.0
  %1053 = vmatprep.subr.mxu0 0.0
  %1054 = vmatpush1.msra.mxu0 0.0
  %1055 = vmatprep.subr.mxu0 0.0
  %1056 = vmatpush1.msra.mxu0 0.0
  %1057 = vmatprep.subr.mxu0 0.0
  %1058 = vmatpush1.msra.mxu0 0.0
  %1059 = vmatprep.subr.mxu0 0.0
  %1060 = vmatpush1.msra.mxu0 0.0
  %1061 = vmatprep.subr.mxu0 0.0
  %1062 = vmatpush1.msra.mxu0 0.0
  %1063 = vmatprep.subr.mxu0 0.0
  %1064 = vmatpush1.msra.mxu0 0.0
  %1065 = vmatprep.subr.mxu0 0.0
  %1066 = vmatpush1.msra.mxu0 0.0
  %1067 = vmatprep.subr.mxu0 0.0
  %1068 = vmatpush1.msra.mxu0 0.0
  %1069 = vmatprep.subr.mxu0 0.0
  %1070 = vmatpush1.msra.mxu0 0.0
  %1071 = vmatprep.subr.mxu0 0.0
  %1072 = vmatpush1.msra.mxu0 0.0
  %1073 = vmatprep.subr.mxu0 0.0
  %1074 = vmatpush1.msra.mxu0 0.0
  %1075 = vmatprep.subr.mxu0 0.0
  %1076 = vmatpush1.msra.mxu0 0.0
  %1077 = vmatprep.subr.mxu0 0.0
  %1078 = vmatpush1.msra.mxu0 0.0
  %1079 = vmatprep.subr.mxu0 0.0
  %1080 = vmatpush1.msra.mxu0 0.0
  %1081 = vmatprep.subr.mxu0 0.0
  %1082 = vmatpush1.msra.mxu0 0.0
  %1083 = vmatprep.subr.mxu0 0.0
  %1084 = vmatpush1.msra.mxu0 0.0
  %1085 = vmatprep.subr.mxu0 0.0
  %1086 = vmatpush1.msra.mxu0 0.0
  %1087 = vmatprep.mubr.f32.mxu0 0.0
  %1088 = vmatmul.mubr.f32.gmra.mrb[0].mxu0 %v1021
  %v1089 = vpop.f32.mrb[0].mxu0
  %v1090 = vadd.f32 %v142, %v1089
  %v1091 = vpop.f32.mrb[0].mxu0
  %1092 = vdwg.mxu0
  %s1093 = scalar_lea.vmem [#allocation2], 40
  %1094 = vst [vmem:[%s1093] sm:$0xff] %v1090
  %s1095 = scalar_lea.vmem %s0, 48
  %v1096 = vld [vmem:[%s1095] sm:$0xff]
  %1097 = vmatprep.subr.mxu0 0.0
  %1098 = vmatpush1.msra.mxu0 %v28
  %1099 = vmatprep.subr.mxu0 0.0
  %1100 = vmatpush1.msra.mxu0 %v29
  %1101 = vmatprep.subr.mxu0 0.0
  %1102 = vmatpush1.msra.mxu0 %v30
  %1103 = vmatprep.subr.mxu0 0.0
  %1104 = vmatpush1.msra.mxu0 %v31
  %1105 = vmatprep.subr.mxu0 0.0
  %1106 = vmatpush1.msra.mxu0 0.0
  %1107 = vmatprep.subr.mxu0 0.0
  %1108 = vmatpush1.msra.mxu0 0.0
  %1109 = vmatprep.subr.mxu0 0.0
  %1110 = vmatpush1.msra.mxu0 0.0
  %1111 = vmatprep.subr.mxu0 0.0
  %1112 = vmatpush1.msra.mxu0 0.0
  %1113 = vmatprep.subr.mxu0 0.0
  %1114 = vmatpush1.msra.mxu0 0.0
  %1115 = vmatprep.subr.mxu0 0.0
  %1116 = vmatpush1.msra.mxu0 0.0
  %1117 = vmatprep.subr.mxu0 0.0
  %1118 = vmatpush1.msra.mxu0 0.0
  %1119 = vmatprep.subr.mxu0 0.0
  %1120 = vmatpush1.msra.mxu0 0.0
  %1121 = vmatprep.subr.mxu0 0.0
  %1122 = vmatpush1.msra.mxu0 0.0
  %1123 = vmatprep.subr.mxu0 0.0
  %1124 = vmatpush1.msra.mxu0 0.0
  %1125 = vmatprep.subr.mxu0 0.0
  %1126 = vmatpush1.msra.mxu0 0.0
  %1127 = vmatprep.subr.mxu0 0.0
  %1128 = vmatpush1.msra.mxu0 0.0
  %1129 = vmatprep.subr.mxu0 0.0
  %1130 = vmatpush1.msra.mxu0 0.0
  %1131 = vmatprep.subr.mxu0 0.0
  %1132 = vmatpush1.msra.mxu0 0.0
  %1133 = vmatprep.subr.mxu0 0.0
  %1134 = vmatpush1.msra.mxu0 0.0
  %1135 = vmatprep.subr.mxu0 0.0
  %1136 = vmatpush1.msra.mxu0 0.0
  %1137 = vmatprep.subr.mxu0 0.0
  %1138 = vmatpush1.msra.mxu0 0.0
  %1139 = vmatprep.subr.mxu0 0.0
  %1140 = vmatpush1.msra.mxu0 0.0
  %1141 = vmatprep.subr.mxu0 0.0
  %1142 = vmatpush1.msra.mxu0 0.0
  %1143 = vmatprep.subr.mxu0 0.0
  %1144 = vmatpush1.msra.mxu0 0.0
  %1145 = vmatprep.subr.mxu0 0.0
  %1146 = vmatpush1.msra.mxu0 0.0
  %1147 = vmatprep.subr.mxu0 0.0
  %1148 = vmatpush1.msra.mxu0 0.0
  %1149 = vmatprep.subr.mxu0 0.0
  %1150 = vmatpush1.msra.mxu0 0.0
  %1151 = vmatprep.subr.mxu0 0.0
  %1152 = vmatpush1.msra.mxu0 0.0
  %1153 = vmatprep.subr.mxu0 0.0
  %1154 = vmatpush1.msra.mxu0 0.0
  %1155 = vmatprep.subr.mxu0 0.0
  %1156 = vmatpush1.msra.mxu0 0.0
  %1157 = vmatprep.subr.mxu0 0.0
  %1158 = vmatpush1.msra.mxu0 0.0
  %1159 = vmatprep.subr.mxu0 0.0
  %1160 = vmatpush1.msra.mxu0 0.0
  %1161 = vmatprep.mubr.f32.mxu0 0.0
  %1162 = vmatmul.mubr.f32.gmra.mrb[0].mxu0 %v1021
  %v1163 = vpop.f32.mrb[0].mxu0
  %v1164 = vadd.f32 0.0, %v1163
  %v1165 = vpop.f32.mrb[0].mxu0
  %1166 = vdwg.mxu0
  %v1167 = vadd.f32 %v1096, %v1164
  %v1168 = vtanh.pop %v1167
  %v1169 = vxor.u32 %v1167, 2147483648
  %v1170 = vmul.f32 %v1169, 1.442695
  %v1171 = vpow.pop %v1170
  %v1172 = vadd.f32 %v1171, 1.0
  %v1173 = vrcp.pop %v1172
  %v1174 = vmul.f32 1.0, %v1173
  %v1175 = vsel %vm27, %v1168, %v1174
  %v1176 = vmul.f32 %v1175, %v1011
  %1178 = vrot.lane.b32.xlu0 %v1175, 64
  %v1179 = vpop.permute.xlu0 %1178
  %v1181 = vmul.f32 %v1175, %v1179
  %1183 = vrot.lane.b32.xlu0 %v1181, 32
  %v1184 = vpop.permute.xlu0 %1183
  %v1186 = vadd.f32 %v1176, %v1184
  %v1187 = vtanh.pop %v1186
  %1189 = vrot.lane.b32.xlu0 %v1187, 64
  %v1190 = vpop.permute.xlu0 %1189
  %v1192 = vmul.f32 %v1175, %v1190
  %1194 = vrot.lane.b32.xlu0 %v1192, 32
  %v1195 = vpop.permute.xlu0 %1194
  %v1196 = vsel %vm38, %v1195, 0
  %1198 = vmatprep.subr.mxu0 0.0
  %1199 = vmatpush1.msra.mxu0 %v32
  %1200 = vmatprep.subr.mxu0 0.0
  %1201 = vmatpush1.msra.mxu0 %v33
  %1202 = vmatprep.subr.mxu0 0.0
  %1203 = vmatpush1.msra.mxu0 %v34
  %1204 = vmatprep.subr.mxu0 0.0
  %1205 = vmatpush1.msra.mxu0 %v35
  %1206 = vmatprep.subr.mxu0 0.0
  %1207 = vmatpush1.msra.mxu0 0.0
  %1208 = vmatprep.subr.mxu0 0.0
  %1209 = vmatpush1.msra.mxu0 0.0
  %1210 = vmatprep.subr.mxu0 0.0
  %1211 = vmatpush1.msra.mxu0 0.0
  %1212 = vmatprep.subr.mxu0 0.0
  %1213 = vmatpush1.msra.mxu0 0.0
  %1214 = vmatprep.subr.mxu0 0.0
  %1215 = vmatpush1.msra.mxu0 0.0
  %1216 = vmatprep.subr.mxu0 0.0
  %1217 = vmatpush1.msra.mxu0 0.0
  %1218 = vmatprep.subr.mxu0 0.0
  %1219 = vmatpush1.msra.mxu0 0.0
  %1220 = vmatprep.subr.mxu0 0.0
  %1221 = vmatpush1.msra.mxu0 0.0
  %1222 = vmatprep.subr.mxu0 0.0
  %1223 = vmatpush1.msra.mxu0 0.0
  %1224 = vmatprep.subr.mxu0 0.0
  %1225 = vmatpush1.msra.mxu0 0.0
  %1226 = vmatprep.subr.mxu0 0.0
  %1227 = vmatpush1.msra.mxu0 0.0
  %1228 = vmatprep.subr.mxu0 0.0
  %1229 = vmatpush1.msra.mxu0 0.0
  %1230 = vmatprep.subr.mxu0 0.0
  %1231 = vmatpush1.msra.mxu0 0.0
  %1232 = vmatprep.subr.mxu0 0.0
  %1233 = vmatpush1.msra.mxu0 0.0
  %1234 = vmatprep.subr.mxu0 0.0
  %1235 = vmatpush1.msra.mxu0 0.0
  %1236 = vmatprep.subr.mxu0 0.0
  %1237 = vmatpush1.msra.mxu0 0.0
  %1238 = vmatprep.subr.mxu0 0.0
  %1239 = vmatpush1.msra.mxu0 0.0
  %1240 = vmatprep.subr.mxu0 0.0
  %1241 = vmatpush1.msra.mxu0 0.0
  %1242 = vmatprep.subr.mxu0 0.0
  %1243 = vmatpush1.msra.mxu0 0.0
  %1244 = vmatprep.subr.mxu0 0.0
  %1245 = vmatpush1.msra.mxu0 0.0
  %1246 = vmatprep.subr.mxu0 0.0
  %1247 = vmatpush1.msra.mxu0 0.0
  %1248 = vmatprep.subr.mxu0 0.0
  %1249 = vmatpush1.msra.mxu0 0.0
  %1250 = vmatprep.subr.mxu0 0.0
  %1251 = vmatpush1.msra.mxu0 0.0
  %1252 = vmatprep.subr.mxu0 0.0
  %1253 = vmatpush1.msra.mxu0 0.0
  %1254 = vmatprep.subr.mxu0 0.0
  %1255 = vmatpush1.msra.mxu0 0.0
  %1256 = vmatprep.subr.mxu0 0.0
  %1257 = vmatpush1.msra.mxu0 0.0
  %1258 = vmatprep.subr.mxu0 0.0
  %1259 = vmatpush1.msra.mxu0 0.0
  %1260 = vmatprep.subr.mxu0 0.0
  %1261 = vmatpush1.msra.mxu0 0.0
  %1262 = vmatprep.mubr.f32.mxu0 0.0
  %1263 = vmatmul.mubr.f32.gmra.mrb[0].mxu0 %v1196
  %v1264 = vpop.f32.mrb[0].mxu0
  %v1265 = vadd.f32 %v142, %v1264
  %v1266 = vpop.f32.mrb[0].mxu0
  %1267 = vdwg.mxu0
  %s1268 = scalar_lea.vmem [#allocation2], 48
  %1269 = vst [vmem:[%s1268] sm:$0xff] %v1265
  %s1270 = scalar_lea.vmem %s0, 56
  %v1271 = vld [vmem:[%s1270] sm:$0xff]
  %1272 = vmatprep.subr.mxu0 0.0
  %1273 = vmatpush1.msra.mxu0 %v28
  %1274 = vmatprep.subr.mxu0 0.0
  %1275 = vmatpush1.msra.mxu0 %v29
  %1276 = vmatprep.subr.mxu0 0.0
  %1277 = vmatpush1.msra.mxu0 %v30
  %1278 = vmatprep.subr.mxu0 0.0
  %1279 = vmatpush1.msra.mxu0 %v31
  %1280 = vmatprep.subr.mxu0 0.0
  %1281 = vmatpush1.msra.mxu0 0.0
  %1282 = vmatprep.subr.mxu0 0.0
  %1283 = vmatpush1.msra.mxu0 0.0
  %1284 = vmatprep.subr.mxu0 0.0
  %1285 = vmatpush1.msra.mxu0 0.0
  %1286 = vmatprep.subr.mxu0 0.0
  %1287 = vmatpush1.msra.mxu0 0.0
  %1288 = vmatprep.subr.mxu0 0.0
  %1289 = vmatpush1.msra.mxu0 0.0
  %1290 = vmatprep.subr.mxu0 0.0
  %1291 = vmatpush1.msra.mxu0 0.0
  %1292 = vmatprep.subr.mxu0 0.0
  %1293 = vmatpush1.msra.mxu0 0.0
  %1294 = vmatprep.subr.mxu0 0.0
  %1295 = vmatpush1.msra.mxu0 0.0
  %1296 = vmatprep.subr.mxu0 0.0
  %1297 = vmatpush1.msra.mxu0 0.0
  %1298 = vmatprep.subr.mxu0 0.0
  %1299 = vmatpush1.msra.mxu0 0.0
  %1300 = vmatprep.subr.mxu0 0.0
  %1301 = vmatpush1.msra.mxu0 0.0
  %1302 = vmatprep.subr.mxu0 0.0
  %1303 = vmatpush1.msra.mxu0 0.0
  %1304 = vmatprep.subr.mxu0 0.0
  %1305 = vmatpush1.msra.mxu0 0.0
  %1306 = vmatprep.subr.mxu0 0.0
  %1307 = vmatpush1.msra.mxu0 0.0
  %1308 = vmatprep.subr.mxu0 0.0
  %1309 = vmatpush1.msra.mxu0 0.0
  %1310 = vmatprep.subr.mxu0 0.0
  %1311 = vmatpush1.msra.mxu0 0.0
  %1312 = vmatprep.subr.mxu0 0.0
  %1313 = vmatpush1.msra.mxu0 0.0
  %1314 = vmatprep.subr.mxu0 0.0
  %1315 = vmatpush1.msra.mxu0 0.0
  %1316 = vmatprep.subr.mxu0 0.0
  %1317 = vmatpush1.msra.mxu0 0.0
  %1318 = vmatprep.subr.mxu0 0.0
  %1319 = vmatpush1.msra.mxu0 0.0
  %1320 = vmatprep.subr.mxu0 0.0
  %1321 = vmatpush1.msra.mxu0 0.0
  %1322 = vmatprep.subr.mxu0 0.0
  %1323 = vmatpush1.msra.mxu0 0.0
  %1324 = vmatprep.subr.mxu0 0.0
  %1325 = vmatpush1.msra.mxu0 0.0
  %1326 = vmatprep.subr.mxu0 0.0
  %1327 = vmatpush1.msra.mxu0 0.0
  %1328 = vmatprep.subr.mxu0 0.0
  %1329 = vmatpush1.msra.mxu0 0.0
  %1330 = vmatprep.subr.mxu0 0.0
  %1331 = vmatpush1.msra.mxu0 0.0
  %1332 = vmatprep.subr.mxu0 0.0
  %1333 = vmatpush1.msra.mxu0 0.0
  %1334 = vmatprep.subr.mxu0 0.0
  %1335 = vmatpush1.msra.mxu0 0.0
  %1336 = vmatprep.mubr.f32.mxu0 0.0
  %1337 = vmatmul.mubr.f32.gmra.mrb[0].mxu0 %v1196
  %v1338 = vpop.f32.mrb[0].mxu0
  %v1339 = vadd.f32 0.0, %v1338
  %v1340 = vpop.f32.mrb[0].mxu0
  %1341 = vdwg.mxu0
  %v1342 = vadd.f32 %v1271, %v1339
  %v1343 = vtanh.pop %v1342
  %v1344 = vxor.u32 %v1342, 2147483648
  %v1345 = vmul.f32 %v1344, 1.442695
  %v1346 = vpow.pop %v1345
  %v1347 = vadd.f32 %v1346, 1.0
  %v1348 = vrcp.pop %v1347
  %v1349 = vmul.f32 1.0, %v1348
  %v1350 = vsel %vm27, %v1343, %v1349
  %v1351 = vmul.f32 %v1350, %v1186
  %1353 = vrot.lane.b32.xlu0 %v1350, 64
  %v1354 = vpop.permute.xlu0 %1353
  %v1356 = vmul.f32 %v1350, %v1354
  %1358 = vrot.lane.b32.xlu0 %v1356, 32
  %v1359 = vpop.permute.xlu0 %1358
  %v1361 = vadd.f32 %v1351, %v1359
  %v1362 = vtanh.pop %v1361
  %1364 = vrot.lane.b32.xlu0 %v1362, 64
  %v1365 = vpop.permute.xlu0 %1364
  %v1367 = vmul.f32 %v1350, %v1365
  %1369 = vrot.lane.b32.xlu0 %v1367, 32
  %v1370 = vpop.permute.xlu0 %1369
  %v1371 = vsel %vm38, %v1370, 0
  %1373 = vmatprep.subr.mxu0 0.0
  %1374 = vmatpush1.msra.mxu0 %v32
  %1375 = vmatprep.subr.mxu0 0.0
  %1376 = vmatpush1.msra.mxu0 %v33
  %1377 = vmatprep.subr.mxu0 0.0
  %1378 = vmatpush1.msra.mxu0 %v34
  %1379 = vmatprep.subr.mxu0 0.0
  %1380 = vmatpush1.msra.mxu0 %v35
  %1381 = vmatprep.subr.mxu0 0.0
  %1382 = vmatpush1.msra.mxu0 0.0
  %1383 = vmatprep.subr.mxu0 0.0
  %1384 = vmatpush1.msra.mxu0 0.0
  %1385 = vmatprep.subr.mxu0 0.0
  %1386 = vmatpush1.msra.mxu0 0.0
  %1387 = vmatprep.subr.mxu0 0.0
  %1388 = vmatpush1.msra.mxu0 0.0
  %1389 = vmatprep.subr.mxu0 0.0
  %1390 = vmatpush1.msra.mxu0 0.0
  %1391 = vmatprep.subr.mxu0 0.0
  %1392 = vmatpush1.msra.mxu0 0.0
  %1393 = vmatprep.subr.mxu0 0.0
  %1394 = vmatpush1.msra.mxu0 0.0
  %1395 = vmatprep.subr.mxu0 0.0
  %1396 = vmatpush1.msra.mxu0 0.0
  %1397 = vmatprep.subr.mxu0 0.0
  %1398 = vmatpush1.msra.mxu0 0.0
  %1399 = vmatprep.subr.mxu0 0.0
  %1400 = vmatpush1.msra.mxu0 0.0
  %1401 = vmatprep.subr.mxu0 0.0
  %1402 = vmatpush1.msra.mxu0 0.0
  %1403 = vmatprep.subr.mxu0 0.0
  %1404 = vmatpush1.msra.mxu0 0.0
  %1405 = vmatprep.subr.mxu0 0.0
  %1406 = vmatpush1.msra.mxu0 0.0
  %1407 = vmatprep.subr.mxu0 0.0
  %1408 = vmatpush1.msra.mxu0 0.0
  %1409 = vmatprep.subr.mxu0 0.0
  %1410 = vmatpush1.msra.mxu0 0.0
  %1411 = vmatprep.subr.mxu0 0.0
  %1412 = vmatpush1.msra.mxu0 0.0
  %1413 = vmatprep.subr.mxu0 0.0
  %1414 = vmatpush1.msra.mxu0 0.0
  %1415 = vmatprep.subr.mxu0 0.0
  %1416 = vmatpush1.msra.mxu0 0.0
  %1417 = vmatprep.subr.mxu0 0.0
  %1418 = vmatpush1.msra.mxu0 0.0
  %1419 = vmatprep.subr.mxu0 0.0
  %1420 = vmatpush1.msra.mxu0 0.0
  %1421 = vmatprep.subr.mxu0 0.0
  %1422 = vmatpush1.msra.mxu0 0.0
  %1423 = vmatprep.subr.mxu0 0.0
  %1424 = vmatpush1.msra.mxu0 0.0
  %1425 = vmatprep.subr.mxu0 0.0
  %1426 = vmatpush1.msra.mxu0 0.0
  %1427 = vmatprep.subr.mxu0 0.0
  %1428 = vmatpush1.msra.mxu0 0.0
  %1429 = vmatprep.subr.mxu0 0.0
  %1430 = vmatpush1.msra.mxu0 0.0
  %1431 = vmatprep.subr.mxu0 0.0
  %1432 = vmatpush1.msra.mxu0 0.0
  %1433 = vmatprep.subr.mxu0 0.0
  %1434 = vmatpush1.msra.mxu0 0.0
  %1435 = vmatprep.subr.mxu0 0.0
  %1436 = vmatpush1.msra.mxu0 0.0
  %1437 = vmatprep.mubr.f32.mxu0 0.0
  %1438 = vmatmul.mubr.f32.gmra.mrb[0].mxu0 %v1371
  %v1439 = vpop.f32.mrb[0].mxu0
  %v1440 = vadd.f32 %v142, %v1439
  %v1441 = vpop.f32.mrb[0].mxu0
  %1442 = vdwg.mxu0
  %s1443 = scalar_lea.vmem [#allocation2], 56
  %1444 = vst [vmem:[%s1443] sm:$0xff] %v1440
  %s1445 = scalar_lea.vmem %s1, 32
  %v1446 = vld [vmem:[%s1445] sm:$0xff]
  %v1447 = vld [vmem:[%s1445 + $0x8] sm:$0xff]
  %v1448 = vld [vmem:[%s1445 + $0x10] sm:$0xff]
  %v1449 = vld [vmem:[%s1445 + $0x18] sm:$0xff]
  %v1450 = vld [vmem:[#allocation2] sm:$0xff]
  %1451 = vmatprep.subr.mxu0 0.0
  %1452 = vmatpush1.msra.mxu0 %v1446
  %1453 = vmatprep.subr.mxu0 0.0
  %1454 = vmatpush1.msra.mxu0 %v1447
  %1455 = vmatprep.subr.mxu0 0.0
  %1456 = vmatpush1.msra.mxu0 %v1448
  %1457 = vmatprep.subr.mxu0 0.0
  %1458 = vmatpush1.msra.mxu0 %v1449
  %1459 = vmatprep.subr.mxu0 0.0
  %1460 = vmatpush1.msra.mxu0 0.0
  %1461 = vmatprep.subr.mxu0 0.0
  %1462 = vmatpush1.msra.mxu0 0.0
  %1463 = vmatprep.subr.mxu0 0.0
  %1464 = vmatpush1.msra.mxu0 0.0
  %1465 = vmatprep.subr.mxu0 0.0
  %1466 = vmatpush1.msra.mxu0 0.0
  %1467 = vmatprep.subr.mxu0 0.0
  %1468 = vmatpush1.msra.mxu0 0.0
  %1469 = vmatprep.subr.mxu0 0.0
  %1470 = vmatpush1.msra.mxu0 0.0
  %1471 = vmatprep.subr.mxu0 0.0
  %1472 = vmatpush1.msra.mxu0 0.0
  %1473 = vmatprep.subr.mxu0 0.0
  %1474 = vmatpush1.msra.mxu0 0.0
  %1475 = vmatprep.subr.mxu0 0.0
  %1476 = vmatpush1.msra.mxu0 0.0
  %1477 = vmatprep.subr.mxu0 0.0
  %1478 = vmatpush1.msra.mxu0 0.0
  %1479 = vmatprep.subr.mxu0 0.0
  %1480 = vmatpush1.msra.mxu0 0.0
  %1481 = vmatprep.subr.mxu0 0.0
  %1482 = vmatpush1.msra.mxu0 0.0
  %1483 = vmatprep.subr.mxu0 0.0
  %1484 = vmatpush1.msra.mxu0 0.0
  %1485 = vmatprep.subr.mxu0 0.0
  %1486 = vmatpush1.msra.mxu0 0.0
  %1487 = vmatprep.subr.mxu0 0.0
  %1488 = vmatpush1.msra.mxu0 0.0
  %1489 = vmatprep.subr.mxu0 0.0
  %1490 = vmatpush1.msra.mxu0 0.0
  %1491 = vmatprep.subr.mxu0 0.0
  %1492 = vmatpush1.msra.mxu0 0.0
  %1493 = vmatprep.subr.mxu0 0.0
  %1494 = vmatpush1.msra.mxu0 0.0
  %1495 = vmatprep.subr.mxu0 0.0
  %1496 = vmatpush1.msra.mxu0 0.0
  %1497 = vmatprep.subr.mxu0 0.0
  %1498 = vmatpush1.msra.mxu0 0.0
  %1499 = vmatprep.subr.mxu0 0.0
  %1500 = vmatpush1.msra.mxu0 0.0
  %1501 = vmatprep.subr.mxu0 0.0
  %1502 = vmatpush1.msra.mxu0 0.0
  %1503 = vmatprep.subr.mxu0 0.0
  %1504 = vmatpush1.msra.mxu0 0.0
  %1505 = vmatprep.subr.mxu0 0.0
  %1506 = vmatpush1.msra.mxu0 0.0
  %1507 = vmatprep.subr.mxu0 0.0
  %1508 = vmatpush1.msra.mxu0 0.0
  %1509 = vmatprep.subr.mxu0 0.0
  %1510 = vmatpush1.msra.mxu0 0.0
  %1511 = vmatprep.subr.mxu0 0.0
  %1512 = vmatpush1.msra.mxu0 0.0
  %1513 = vmatprep.subr.mxu0 0.0
  %1514 = vmatpush1.msra.mxu0 0.0
  %1515 = vmatprep.mubr.f32.mxu0 0.0
  %1516 = vmatmul.mubr.f32.gmra.mrb[0].mxu0 %v40
  %v1517 = vpop.f32.mrb[0].mxu0
  %v1518 = vadd.f32 0.0, %v1517
  %v1519 = vpop.f32.mrb[0].mxu0
  %1520 = vdwg.mxu0
  %v1521 = vadd.f32 %v1450, %v1518
  %v1522 = vtanh.pop %v1521
  %v1523 = vxor.u32 %v1521, 2147483648
  %v1524 = vmul.f32 %v1523, 1.442695
  %v1525 = vpow.pop %v1524
  %v1526 = vadd.f32 %v1525, 1.0
  %v1527 = vrcp.pop %v1526
  %v1528 = vmul.f32 1.0, %v1527
  %v1529 = vsel %vm27, %v1522, %v1528
  %v1530 = vmul.f32 %v1529, 0.0
  %1532 = vrot.lane.b32.xlu0 %v1529, 64
  %v1533 = vpop.permute.xlu0 %1532
  %v1535 = vmul.f32 %v1529, %v1533
  %1537 = vrot.lane.b32.xlu0 %v1535, 32
  %v1538 = vpop.permute.xlu0 %1537
  %v1540 = vadd.f32 %v1530, %v1538
  %v1541 = vtanh.pop %v1540
  %1543 = vrot.lane.b32.xlu0 %v1541, 64
  %v1544 = vpop.permute.xlu0 %1543
  %v1546 = vmul.f32 %v1529, %v1544
  %v1547 = vld [vmem:[%s393] sm:$0xff]
  %1549 = vrot.lane.b32.xlu0 %v1546, 32
  %v1550 = vpop.permute.xlu0 %1549
  %v1551 = vsel %vm38, %v1550, 0
  %1553 = vmatprep.subr.mxu0 0.0
  %1554 = vmatpush1.msra.mxu0 %v1446
  %1555 = vmatprep.subr.mxu0 0.0
  %1556 = vmatpush1.msra.mxu0 %v1447
  %1557 = vmatprep.subr.mxu0 0.0
  %1558 = vmatpush1.msra.mxu0 %v1448
  %1559 = vmatprep.subr.mxu0 0.0
  %1560 = vmatpush1.msra.mxu0 %v1449
  %1561 = vmatprep.subr.mxu0 0.0
  %1562 = vmatpush1.msra.mxu0 0.0
  %1563 = vmatprep.subr.mxu0 0.0
  %1564 = vmatpush1.msra.mxu0 0.0
  %1565 = vmatprep.subr.mxu0 0.0
  %1566 = vmatpush1.msra.mxu0 0.0
  %1567 = vmatprep.subr.mxu0 0.0
  %1568 = vmatpush1.msra.mxu0 0.0
  %1569 = vmatprep.subr.mxu0 0.0
  %1570 = vmatpush1.msra.mxu0 0.0
  %1571 = vmatprep.subr.mxu0 0.0
  %1572 = vmatpush1.msra.mxu0 0.0
  %1573 = vmatprep.subr.mxu0 0.0
  %1574 = vmatpush1.msra.mxu0 0.0
  %1575 = vmatprep.subr.mxu0 0.0
  %1576 = vmatpush1.msra.mxu0 0.0
  %1577 = vmatprep.subr.mxu0 0.0
  %1578 = vmatpush1.msra.mxu0 0.0
  %1579 = vmatprep.subr.mxu0 0.0
  %1580 = vmatpush1.msra.mxu0 0.0
  %1581 = vmatprep.subr.mxu0 0.0
  %1582 = vmatpush1.msra.mxu0 0.0
  %1583 = vmatprep.subr.mxu0 0.0
  %1584 = vmatpush1.msra.mxu0 0.0
  %1585 = vmatprep.subr.mxu0 0.0
  %1586 = vmatpush1.msra.mxu0 0.0
  %1587 = vmatprep.subr.mxu0 0.0
  %1588 = vmatpush1.msra.mxu0 0.0
  %1589 = vmatprep.subr.mxu0 0.0
  %1590 = vmatpush1.msra.mxu0 0.0
  %1591 = vmatprep.subr.mxu0 0.0
  %1592 = vmatpush1.msra.mxu0 0.0
  %1593 = vmatprep.subr.mxu0 0.0
  %1594 = vmatpush1.msra.mxu0 0.0
  %1595 = vmatprep.subr.mxu0 0.0
  %1596 = vmatpush1.msra.mxu0 0.0
  %1597 = vmatprep.subr.mxu0 0.0
  %1598 = vmatpush1.msra.mxu0 0.0
  %1599 = vmatprep.subr.mxu0 0.0
  %1600 = vmatpush1.msra.mxu0 0.0
  %1601 = vmatprep.subr.mxu0 0.0
  %1602 = vmatpush1.msra.mxu0 0.0
  %1603 = vmatprep.subr.mxu0 0.0
  %1604 = vmatpush1.msra.mxu0 0.0
  %1605 = vmatprep.subr.mxu0 0.0
  %1606 = vmatpush1.msra.mxu0 0.0
  %1607 = vmatprep.subr.mxu0 0.0
  %1608 = vmatpush1.msra.mxu0 0.0
  %1609 = vmatprep.subr.mxu0 0.0
  %1610 = vmatpush1.msra.mxu0 0.0
  %1611 = vmatprep.subr.mxu0 0.0
  %1612 = vmatpush1.msra.mxu0 0.0
  %1613 = vmatprep.subr.mxu0 0.0
  %1614 = vmatpush1.msra.mxu0 0.0
  %1615 = vmatprep.subr.mxu0 0.0
  %1616 = vmatpush1.msra.mxu0 0.0
  %1617 = vmatprep.mubr.f32.mxu0 0.0
  %1618 = vmatmul.mubr.f32.gmra.mrb[0].mxu0 %v1551
  %v1619 = vpop.f32.mrb[0].mxu0
  %v1620 = vadd.f32 0.0, %v1619
  %v1621 = vpop.f32.mrb[0].mxu0
  %1622 = vdwg.mxu0
  %v1623 = vadd.f32 %v1547, %v1620
  %v1624 = vtanh.pop %v1623
  %v1625 = vxor.u32 %v1623, 2147483648
  %v1626 = vmul.f32 %v1625, 1.442695
  %v1627 = vpow.pop %v1626
  %v1628 = vadd.f32 %v1627, 1.0
  %v1629 = vrcp.pop %v1628
  %v1630 = vmul.f32 1.0, %v1629
  %v1631 = vsel %vm27, %v1624, %v1630
  %v1632 = vmul.f32 %v1631, %v1540
  %1634 = vrot.lane.b32.xlu0 %v1631, 64
  %v1635 = vpop.permute.xlu0 %1634
  %v1637 = vmul.f32 %v1631, %v1635
  %1639 = vrot.lane.b32.xlu0 %v1637, 32
  %v1640 = vpop.permute.xlu0 %1639
  %v1642 = vadd.f32 %v1632, %v1640
  %v1643 = vtanh.pop %v1642
  %1645 = vrot.lane.b32.xlu0 %v1643, 64
  %v1646 = vpop.permute.xlu0 %1645
  %v1648 = vmul.f32 %v1631, %v1646
  %v1649 = vld [vmem:[%s568] sm:$0xff]
  %1651 = vrot.lane.b32.xlu0 %v1648, 32
  %v1652 = vpop.permute.xlu0 %1651
  %v1653 = vsel %vm38, %v1652, 0
  %1655 = vmatprep.subr.mxu0 0.0
  %1656 = vmatpush1.msra.mxu0 %v1446
  %1657 = vmatprep.subr.mxu0 0.0
  %1658 = vmatpush1.msra.mxu0 %v1447
  %1659 = vmatprep.subr.mxu0 0.0
  %1660 = vmatpush1.msra.mxu0 %v1448
  %1661 = vmatprep.subr.mxu0 0.0
  %1662 = vmatpush1.msra.mxu0 %v1449
  %1663 = vmatprep.subr.mxu0 0.0
  %1664 = vmatpush1.msra.mxu0 0.0
  %1665 = vmatprep.subr.mxu0 0.0
  %1666 = vmatpush1.msra.mxu0 0.0
  %1667 = vmatprep.subr.mxu0 0.0
  %1668 = vmatpush1.msra.mxu0 0.0
  %1669 = vmatprep.subr.mxu0 0.0
  %1670 = vmatpush1.msra.mxu0 0.0
  %1671 = vmatprep.subr.mxu0 0.0
  %1672 = vmatpush1.msra.mxu0 0.0
  %1673 = vmatprep.subr.mxu0 0.0
  %1674 = vmatpush1.msra.mxu0 0.0
  %1675 = vmatprep.subr.mxu0 0.0
  %1676 = vmatpush1.msra.mxu0 0.0
  %1677 = vmatprep.subr.mxu0 0.0
  %1678 = vmatpush1.msra.mxu0 0.0
  %1679 = vmatprep.subr.mxu0 0.0
  %1680 = vmatpush1.msra.mxu0 0.0
  %1681 = vmatprep.subr.mxu0 0.0
  %1682 = vmatpush1.msra.mxu0 0.0
  %1683 = vmatprep.subr.mxu0 0.0
  %1684 = vmatpush1.msra.mxu0 0.0
  %1685 = vmatprep.subr.mxu0 0.0
  %1686 = vmatpush1.msra.mxu0 0.0
  %1687 = vmatprep.subr.mxu0 0.0
  %1688 = vmatpush1.msra.mxu0 0.0
  %1689 = vmatprep.subr.mxu0 0.0
  %1690 = vmatpush1.msra.mxu0 0.0
  %1691 = vmatprep.subr.mxu0 0.0
  %1692 = vmatpush1.msra.mxu0 0.0
  %1693 = vmatprep.subr.mxu0 0.0
  %1694 = vmatpush1.msra.mxu0 0.0
  %1695 = vmatprep.subr.mxu0 0.0
  %1696 = vmatpush1.msra.mxu0 0.0
  %1697 = vmatprep.subr.mxu0 0.0
  %1698 = vmatpush1.msra.mxu0 0.0
  %1699 = vmatprep.subr.mxu0 0.0
  %1700 = vmatpush1.msra.mxu0 0.0
  %1701 = vmatprep.subr.mxu0 0.0
  %1702 = vmatpush1.msra.mxu0 0.0
  %1703 = vmatprep.subr.mxu0 0.0
  %1704 = vmatpush1.msra.mxu0 0.0
  %1705 = vmatprep.subr.mxu0 0.0
  %1706 = vmatpush1.msra.mxu0 0.0
  %1707 = vmatprep.subr.mxu0 0.0
  %1708 = vmatpush1.msra.mxu0 0.0
  %1709 = vmatprep.subr.mxu0 0.0
  %1710 = vmatpush1.msra.mxu0 0.0
  %1711 = vmatprep.subr.mxu0 0.0
  %1712 = vmatpush1.msra.mxu0 0.0
  %1713 = vmatprep.subr.mxu0 0.0
  %1714 = vmatpush1.msra.mxu0 0.0
  %1715 = vmatprep.subr.mxu0 0.0
  %1716 = vmatpush1.msra.mxu0 0.0
  %1717 = vmatprep.subr.mxu0 0.0
  %1718 = vmatpush1.msra.mxu0 0.0
  %1719 = vmatprep.mubr.f32.mxu0 0.0
  %1720 = vmatmul.mubr.f32.gmra.mrb[0].mxu0 %v1653
  %v1721 = vpop.f32.mrb[0].mxu0
  %v1722 = vadd.f32 0.0, %v1721
  %v1723 = vpop.f32.mrb[0].mxu0
  %1724 = vdwg.mxu0
  %v1725 = vadd.f32 %v1649, %v1722
  %v1726 = vtanh.pop %v1725
  %v1727 = vxor.u32 %v1725, 2147483648
  %v1728 = vmul.f32 %v1727, 1.442695
  %v1729 = vpow.pop %v1728
  %v1730 = vadd.f32 %v1729, 1.0
  %v1731 = vrcp.pop %v1730
  %v1732 = vmul.f32 1.0, %v1731
  %v1733 = vsel %vm27, %v1726, %v1732
  %v1734 = vmul.f32 %v1733, %v1642
  %1736 = vrot.lane.b32.xlu0 %v1733, 64
  %v1737 = vpop.permute.xlu0 %1736
  %v1739 = vmul.f32 %v1733, %v1737
  %1741 = vrot.lane.b32.xlu0 %v1739, 32
  %v1742 = vpop.permute.xlu0 %1741
  %v1744 = vadd.f32 %v1734, %v1742
  %v1745 = vtanh.pop %v1744
  %1747 = vrot.lane.b32.xlu0 %v1745, 64
  %v1748 = vpop.permute.xlu0 %1747
  %v1750 = vmul.f32 %v1733, %v1748
  %v1751 = vld [vmem:[%s743] sm:$0xff]
  %1753 = vrot.lane.b32.xlu0 %v1750, 32
  %v1754 = vpop.permute.xlu0 %1753
  %v1755 = vsel %vm38, %v1754, 0
  %1757 = vmatprep.subr.mxu0 0.0
  %1758 = vmatpush1.msra.mxu0 %v1446
  %1759 = vmatprep.subr.mxu0 0.0
  %1760 = vmatpush1.msra.mxu0 %v1447
  %1761 = vmatprep.subr.mxu0 0.0
  %1762 = vmatpush1.msra.mxu0 %v1448
  %1763 = vmatprep.subr.mxu0 0.0
  %1764 = vmatpush1.msra.mxu0 %v1449
  %1765 = vmatprep.subr.mxu0 0.0
  %1766 = vmatpush1.msra.mxu0 0.0
  %1767 = vmatprep.subr.mxu0 0.0
  %1768 = vmatpush1.msra.mxu0 0.0
  %1769 = vmatprep.subr.mxu0 0.0
  %1770 = vmatpush1.msra.mxu0 0.0
  %1771 = vmatprep.subr.mxu0 0.0
  %1772 = vmatpush1.msra.mxu0 0.0
  %1773 = vmatprep.subr.mxu0 0.0
  %1774 = vmatpush1.msra.mxu0 0.0
  %1775 = vmatprep.subr.mxu0 0.0
  %1776 = vmatpush1.msra.mxu0 0.0
  %1777 = vmatprep.subr.mxu0 0.0
  %1778 = vmatpush1.msra.mxu0 0.0
  %1779 = vmatprep.subr.mxu0 0.0
  %1780 = vmatpush1.msra.mxu0 0.0
  %1781 = vmatprep.subr.mxu0 0.0
  %1782 = vmatpush1.msra.mxu0 0.0
  %1783 = vmatprep.subr.mxu0 0.0
  %1784 = vmatpush1.msra.mxu0 0.0
  %1785 = vmatprep.subr.mxu0 0.0
  %1786 = vmatpush1.msra.mxu0 0.0
  %1787 = vmatprep.subr.mxu0 0.0
  %1788 = vmatpush1.msra.mxu0 0.0
  %1789 = vmatprep.subr.mxu0 0.0
  %1790 = vmatpush1.msra.mxu0 0.0
  %1791 = vmatprep.subr.mxu0 0.0
  %1792 = vmatpush1.msra.mxu0 0.0
  %1793 = vmatprep.subr.mxu0 0.0
  %1794 = vmatpush1.msra.mxu0 0.0
  %1795 = vmatprep.subr.mxu0 0.0
  %1796 = vmatpush1.msra.mxu0 0.0
  %1797 = vmatprep.subr.mxu0 0.0
  %1798 = vmatpush1.msra.mxu0 0.0
  %1799 = vmatprep.subr.mxu0 0.0
  %1800 = vmatpush1.msra.mxu0 0.0
  %1801 = vmatprep.subr.mxu0 0.0
  %1802 = vmatpush1.msra.mxu0 0.0
  %1803 = vmatprep.subr.mxu0 0.0
  %1804 = vmatpush1.msra.mxu0 0.0
  %1805 = vmatprep.subr.mxu0 0.0
  %1806 = vmatpush1.msra.mxu0 0.0
  %1807 = vmatprep.subr.mxu0 0.0
  %1808 = vmatpush1.msra.mxu0 0.0
  %1809 = vmatprep.subr.mxu0 0.0
  %1810 = vmatpush1.msra.mxu0 0.0
  %1811 = vmatprep.subr.mxu0 0.0
  %1812 = vmatpush1.msra.mxu0 0.0
  %1813 = vmatprep.subr.mxu0 0.0
  %1814 = vmatpush1.msra.mxu0 0.0
  %1815 = vmatprep.subr.mxu0 0.0
  %1816 = vmatpush1.msra.mxu0 0.0
  %1817 = vmatprep.subr.mxu0 0.0
  %1818 = vmatpush1.msra.mxu0 0.0
  %1819 = vmatprep.subr.mxu0 0.0
  %1820 = vmatpush1.msra.mxu0 0.0
  %1821 = vmatprep.mubr.f32.mxu0 0.0
  %1822 = vmatmul.mubr.f32.gmra.mrb[0].mxu0 %v1755
  %v1823 = vpop.f32.mrb[0].mxu0
  %v1824 = vadd.f32 0.0, %v1823
  %v1825 = vpop.f32.mrb[0].mxu0
  %1826 = vdwg.mxu0
  %v1827 = vadd.f32 %v1751, %v1824
  %v1828 = vtanh.pop %v1827
  %v1829 = vxor.u32 %v1827, 2147483648
  %v1830 = vmul.f32 %v1829, 1.442695
  %v1831 = vpow.pop %v1830
  %v1832 = vadd.f32 %v1831, 1.0
  %v1833 = vrcp.pop %v1832
  %v1834 = vmul.f32 1.0, %v1833
  %v1835 = vsel %vm27, %v1828, %v1834
  %v1836 = vmul.f32 %v1835, %v1744
  %1838 = vrot.lane.b32.xlu0 %v1835, 64
  %v1839 = vpop.permute.xlu0 %1838
  %v1841 = vmul.f32 %v1835, %v1839
  %1843 = vrot.lane.b32.xlu0 %v1841, 32
  %v1844 = vpop.permute.xlu0 %1843
  %v1846 = vadd.f32 %v1836, %v1844
  %v1847 = vtanh.pop %v1846
  %1849 = vrot.lane.b32.xlu0 %v1847, 64
  %v1850 = vpop.permute.xlu0 %1849
  %v1852 = vmul.f32 %v1835, %v1850
  %v1853 = vld [vmem:[%s918] sm:$0xff]
  %1855 = vrot.lane.b32.xlu0 %v1852, 32
  %v1856 = vpop.permute.xlu0 %1855
  %v1857 = vsel %vm38, %v1856, 0
  %1859 = vmatprep.subr.mxu0 0.0
  %1860 = vmatpush1.msra.mxu0 %v1446
  %1861 = vmatprep.subr.mxu0 0.0
  %1862 = vmatpush1.msra.mxu0 %v1447
  %1863 = vmatprep.subr.mxu0 0.0
  %1864 = vmatpush1.msra.mxu0 %v1448
  %1865 = vmatprep.subr.mxu0 0.0
  %1866 = vmatpush1.msra.mxu0 %v1449
  %1867 = vmatprep.subr.mxu0 0.0
  %1868 = vmatpush1.msra.mxu0 0.0
  %1869 = vmatprep.subr.mxu0 0.0
  %1870 = vmatpush1.msra.mxu0 0.0
  %1871 = vmatprep.subr.mxu0 0.0
  %1872 = vmatpush1.msra.mxu0 0.0
  %1873 = vmatprep.subr.mxu0 0.0
  %1874 = vmatpush1.msra.mxu0 0.0
  %1875 = vmatprep.subr.mxu0 0.0
  %1876 = vmatpush1.msra.mxu0 0.0
  %1877 = vmatprep.subr.mxu0 0.0
  %1878 = vmatpush1.msra.mxu0 0.0
  %1879 = vmatprep.subr.mxu0 0.0
  %1880 = vmatpush1.msra.mxu0 0.0
  %1881 = vmatprep.subr.mxu0 0.0
  %1882 = vmatpush1.msra.mxu0 0.0
  %1883 = vmatprep.subr.mxu0 0.0
  %1884 = vmatpush1.msra.mxu0 0.0
  %1885 = vmatprep.subr.mxu0 0.0
  %1886 = vmatpush1.msra.mxu0 0.0
  %1887 = vmatprep.subr.mxu0 0.0
  %1888 = vmatpush1.msra.mxu0 0.0
  %1889 = vmatprep.subr.mxu0 0.0
  %1890 = vmatpush1.msra.mxu0 0.0
  %1891 = vmatprep.subr.mxu0 0.0
  %1892 = vmatpush1.msra.mxu0 0.0
  %1893 = vmatprep.subr.mxu0 0.0
  %1894 = vmatpush1.msra.mxu0 0.0
  %1895 = vmatprep.subr.mxu0 0.0
  %1896 = vmatpush1.msra.mxu0 0.0
  %1897 = vmatprep.subr.mxu0 0.0
  %1898 = vmatpush1.msra.mxu0 0.0
  %1899 = vmatprep.subr.mxu0 0.0
  %1900 = vmatpush1.msra.mxu0 0.0
  %1901 = vmatprep.subr.mxu0 0.0
  %1902 = vmatpush1.msra.mxu0 0.0
  %1903 = vmatprep.subr.mxu0 0.0
  %1904 = vmatpush1.msra.mxu0 0.0
  %1905 = vmatprep.subr.mxu0 0.0
  %1906 = vmatpush1.msra.mxu0 0.0
  %1907 = vmatprep.subr.mxu0 0.0
  %1908 = vmatpush1.msra.mxu0 0.0
  %1909 = vmatprep.subr.mxu0 0.0
  %1910 = vmatpush1.msra.mxu0 0.0
  %1911 = vmatprep.subr.mxu0 0.0
  %1912 = vmatpush1.msra.mxu0 0.0
  %1913 = vmatprep.subr.mxu0 0.0
  %1914 = vmatpush1.msra.mxu0 0.0
  %1915 = vmatprep.subr.mxu0 0.0
  %1916 = vmatpush1.msra.mxu0 0.0
  %1917 = vmatprep.subr.mxu0 0.0
  %1918 = vmatpush1.msra.mxu0 0.0
  %1919 = vmatprep.subr.mxu0 0.0
  %1920 = vmatpush1.msra.mxu0 0.0
  %1921 = vmatprep.subr.mxu0 0.0
  %1922 = vmatpush1.msra.mxu0 0.0
  %1923 = vmatprep.mubr.f32.mxu0 0.0
  %1924 = vmatmul.mubr.f32.gmra.mrb[0].mxu0 %v1857
  %v1925 = vpop.f32.mrb[0].mxu0
  %v1926 = vadd.f32 0.0, %v1925
  %v1927 = vpop.f32.mrb[0].mxu0
  %1928 = vdwg.mxu0
  %v1929 = vadd.f32 %v1853, %v1926
  %v1930 = vtanh.pop %v1929
  %v1931 = vxor.u32 %v1929, 2147483648
  %v1932 = vmul.f32 %v1931, 1.442695
  %v1933 = vpow.pop %v1932
  %v1934 = vadd.f32 %v1933, 1.0
  %v1935 = vrcp.pop %v1934
  %v1936 = vmul.f32 1.0, %v1935
  %v1937 = vsel %vm27, %v1930, %v1936
  %v1938 = vmul.f32 %v1937, %v1846
  %1940 = vrot.lane.b32.xlu0 %v1937, 64
  %v1941 = vpop.permute.xlu0 %1940
  %v1943 = vmul.f32 %v1937, %v1941
  %1945 = vrot.lane.b32.xlu0 %v1943, 32
  %v1946 = vpop.permute.xlu0 %1945
  %v1948 = vadd.f32 %v1938, %v1946
  %v1949 = vtanh.pop %v1948
  %1951 = vrot.lane.b32.xlu0 %v1949, 64
  %v1952 = vpop.permute.xlu0 %1951
  %v1954 = vmul.f32 %v1937, %v1952
  %v1955 = vld [vmem:[%s1093] sm:$0xff]
  %1957 = vrot.lane.b32.xlu0 %v1954, 32
  %v1958 = vpop.permute.xlu0 %1957
  %v1959 = vsel %vm38, %v1958, 0
  %1961 = vmatprep.subr.mxu0 0.0
  %1962 = vmatpush1.msra.mxu0 %v1446
  %1963 = vmatprep.subr.mxu0 0.0
  %1964 = vmatpush1.msra.mxu0 %v1447
  %1965 = vmatprep.subr.mxu0 0.0
  %1966 = vmatpush1.msra.mxu0 %v1448
  %1967 = vmatprep.subr.mxu0 0.0
  %1968 = vmatpush1.msra.mxu0 %v1449
  %1969 = vmatprep.subr.mxu0 0.0
  %1970 = vmatpush1.msra.mxu0 0.0
  %1971 = vmatprep.subr.mxu0 0.0
  %1972 = vmatpush1.msra.mxu0 0.0
  %1973 = vmatprep.subr.mxu0 0.0
  %1974 = vmatpush1.msra.mxu0 0.0
  %1975 = vmatprep.subr.mxu0 0.0
  %1976 = vmatpush1.msra.mxu0 0.0
  %1977 = vmatprep.subr.mxu0 0.0
  %1978 = vmatpush1.msra.mxu0 0.0
  %1979 = vmatprep.subr.mxu0 0.0
  %1980 = vmatpush1.msra.mxu0 0.0
  %1981 = vmatprep.subr.mxu0 0.0
  %1982 = vmatpush1.msra.mxu0 0.0
  %1983 = vmatprep.subr.mxu0 0.0
  %1984 = vmatpush1.msra.mxu0 0.0
  %1985 = vmatprep.subr.mxu0 0.0
  %1986 = vmatpush1.msra.mxu0 0.0
  %1987 = vmatprep.subr.mxu0 0.0
  %1988 = vmatpush1.msra.mxu0 0.0
  %1989 = vmatprep.subr.mxu0 0.0
  %1990 = vmatpush1.msra.mxu0 0.0
  %1991 = vmatprep.subr.mxu0 0.0
  %1992 = vmatpush1.msra.mxu0 0.0
  %1993 = vmatprep.subr.mxu0 0.0
  %1994 = vmatpush1.msra.mxu0 0.0
  %1995 = vmatprep.subr.mxu0 0.0
  %1996 = vmatpush1.msra.mxu0 0.0
  %1997 = vmatprep.subr.mxu0 0.0
  %1998 = vmatpush1.msra.mxu0 0.0
  %1999 = vmatprep.subr.mxu0 0.0
  %2000 = vmatpush1.msra.mxu0 0.0
  %2001 = vmatprep.subr.mxu0 0.0
  %2002 = vmatpush1.msra.mxu0 0.0
  %2003 = vmatprep.subr.mxu0 0.0
  %2004 = vmatpush1.msra.mxu0 0.0
  %2005 = vmatprep.subr.mxu0 0.0
  %2006 = vmatpush1.msra.mxu0 0.0
  %2007 = vmatprep.subr.mxu0 0.0
  %2008 = vmatpush1.msra.mxu0 0.0
  %2009 = vmatprep.subr.mxu0 0.0
  %2010 = vmatpush1.msra.mxu0 0.0
  %2011 = vmatprep.subr.mxu0 0.0
  %2012 = vmatpush1.msra.mxu0 0.0
  %2013 = vmatprep.subr.mxu0 0.0
  %2014 = vmatpush1.msra.mxu0 0.0
  %2015 = vmatprep.subr.mxu0 0.0
  %2016 = vmatpush1.msra.mxu0 0.0
  %2017 = vmatprep.subr.mxu0 0.0
  %2018 = vmatpush1.msra.mxu0 0.0
  %2019 = vmatprep.subr.mxu0 0.0
  %2020 = vmatpush1.msra.mxu0 0.0
  %2021 = vmatprep.subr.mxu0 0.0
  %2022 = vmatpush1.msra.mxu0 0.0
  %2023 = vmatprep.subr.mxu0 0.0
  %2024 = vmatpush1.msra.mxu0 0.0
  %2025 = vmatprep.mubr.f32.mxu0 0.0
  %2026 = vmatmul.mubr.f32.gmra.mrb[0].mxu0 %v1959
  %v2027 = vpop.f32.mrb[0].mxu0
  %v2028 = vadd.f32 0.0, %v2027
  %v2029 = vpop.f32.mrb[0].mxu0
  %2030 = vdwg.mxu0
  %v2031 = vadd.f32 %v1955, %v2028
  %v2032 = vtanh.pop %v2031
  %v2033 = vxor.u32 %v2031, 2147483648
  %v2034 = vmul.f32 %v2033, 1.442695
  %v2035 = vpow.pop %v2034
  %v2036 = vadd.f32 %v2035, 1.0
  %v2037 = vrcp.pop %v2036
  %v2038 = vmul.f32 1.0, %v2037
  %v2039 = vsel %vm27, %v2032, %v2038
  %v2040 = vmul.f32 %v2039, %v1948
  %2042 = vrot.lane.b32.xlu0 %v2039, 64
  %v2043 = vpop.permute.xlu0 %2042
  %v2045 = vmul.f32 %v2039, %v2043
  %2047 = vrot.lane.b32.xlu0 %v2045, 32
  %v2048 = vpop.permute.xlu0 %2047
  %v2050 = vadd.f32 %v2040, %v2048
  %v2051 = vtanh.pop %v2050
  %2053 = vrot.lane.b32.xlu0 %v2051, 64
  %v2054 = vpop.permute.xlu0 %2053
  %v2056 = vmul.f32 %v2039, %v2054
  %v2057 = vld [vmem:[%s1268] sm:$0xff]
  %2059 = vrot.lane.b32.xlu0 %v2056, 32
  %v2060 = vpop.permute.xlu0 %2059
  %v2061 = vsel %vm38, %v2060, 0
  %2063 = vmatprep.subr.mxu0 0.0
  %2064 = vmatpush1.msra.mxu0 %v1446
  %2065 = vmatprep.subr.mxu0 0.0
  %2066 = vmatpush1.msra.mxu0 %v1447
  %2067 = vmatprep.subr.mxu0 0.0
  %2068 = vmatpush1.msra.mxu0 %v1448
  %2069 = vmatprep.subr.mxu0 0.0
  %2070 = vmatpush1.msra.mxu0 %v1449
  %2071 = vmatprep.subr.mxu0 0.0
  %2072 = vmatpush1.msra.mxu0 0.0
  %2073 = vmatprep.subr.mxu0 0.0
  %2074 = vmatpush1.msra.mxu0 0.0
  %2075 = vmatprep.subr.mxu0 0.0
  %2076 = vmatpush1.msra.mxu0 0.0
  %2077 = vmatprep.subr.mxu0 0.0
  %2078 = vmatpush1.msra.mxu0 0.0
  %2079 = vmatprep.subr.mxu0 0.0
  %2080 = vmatpush1.msra.mxu0 0.0
  %2081 = vmatprep.subr.mxu0 0.0
  %2082 = vmatpush1.msra.mxu0 0.0
  %2083 = vmatprep.subr.mxu0 0.0
  %2084 = vmatpush1.msra.mxu0 0.0
  %2085 = vmatprep.subr.mxu0 0.0
  %2086 = vmatpush1.msra.mxu0 0.0
  %2087 = vmatprep.subr.mxu0 0.0
  %2088 = vmatpush1.msra.mxu0 0.0
  %2089 = vmatprep.subr.mxu0 0.0
  %2090 = vmatpush1.msra.mxu0 0.0
  %2091 = vmatprep.subr.mxu0 0.0
  %2092 = vmatpush1.msra.mxu0 0.0
  %2093 = vmatprep.subr.mxu0 0.0
  %2094 = vmatpush1.msra.mxu0 0.0
  %2095 = vmatprep.subr.mxu0 0.0
  %2096 = vmatpush1.msra.mxu0 0.0
  %2097 = vmatprep.subr.mxu0 0.0
  %2098 = vmatpush1.msra.mxu0 0.0
  %2099 = vmatprep.subr.mxu0 0.0
  %2100 = vmatpush1.msra.mxu0 0.0
  %2101 = vmatprep.subr.mxu0 0.0
  %2102 = vmatpush1.msra.mxu0 0.0
  %2103 = vmatprep.subr.mxu0 0.0
  %2104 = vmatpush1.msra.mxu0 0.0
  %2105 = vmatprep.subr.mxu0 0.0
  %2106 = vmatpush1.msra.mxu0 0.0
  %2107 = vmatprep.subr.mxu0 0.0
  %2108 = vmatpush1.msra.mxu0 0.0
  %2109 = vmatprep.subr.mxu0 0.0
  %2110 = vmatpush1.msra.mxu0 0.0
  %2111 = vmatprep.subr.mxu0 0.0
  %2112 = vmatpush1.msra.mxu0 0.0
  %2113 = vmatprep.subr.mxu0 0.0
  %2114 = vmatpush1.msra.mxu0 0.0
  %2115 = vmatprep.subr.mxu0 0.0
  %2116 = vmatpush1.msra.mxu0 0.0
  %2117 = vmatprep.subr.mxu0 0.0
  %2118 = vmatpush1.msra.mxu0 0.0
  %2119 = vmatprep.subr.mxu0 0.0
  %2120 = vmatpush1.msra.mxu0 0.0
  %2121 = vmatprep.subr.mxu0 0.0
  %2122 = vmatpush1.msra.mxu0 0.0
  %2123 = vmatprep.subr.mxu0 0.0
  %2124 = vmatpush1.msra.mxu0 0.0
  %2125 = vmatprep.subr.mxu0 0.0
  %2126 = vmatpush1.msra.mxu0 0.0
  %2127 = vmatprep.mubr.f32.mxu0 0.0
  %2128 = vmatmul.mubr.f32.gmra.mrb[0].mxu0 %v2061
  %v2129 = vpop.f32.mrb[0].mxu0
  %v2130 = vadd.f32 0.0, %v2129
  %v2131 = vpop.f32.mrb[0].mxu0
  %2132 = vdwg.mxu0
  %v2133 = vadd.f32 %v2057, %v2130
  %v2134 = vtanh.pop %v2133
  %v2135 = vxor.u32 %v2133, 2147483648
  %v2136 = vmul.f32 %v2135, 1.442695
  %v2137 = vpow.pop %v2136
  %v2138 = vadd.f32 %v2137, 1.0
  %v2139 = vrcp.pop %v2138
  %v2140 = vmul.f32 1.0, %v2139
  %v2141 = vsel %vm27, %v2134, %v2140
  %v2142 = vmul.f32 %v2141, %v2050
  %2144 = vrot.lane.b32.xlu0 %v2141, 64
  %v2145 = vpop.permute.xlu0 %2144
  %v2147 = vmul.f32 %v2141, %v2145
  %2149 = vrot.lane.b32.xlu0 %v2147, 32
  %v2150 = vpop.permute.xlu0 %2149
  %v2152 = vadd.f32 %v2142, %v2150
  %v2153 = vtanh.pop %v2152
  %2155 = vrot.lane.b32.xlu0 %v2153, 64
  %v2156 = vpop.permute.xlu0 %2155
  %v2158 = vmul.f32 %v2141, %v2156
  %v2159 = vld [vmem:[%s1443] sm:$0xff]
  %2161 = vrot.lane.b32.xlu0 %v2158, 32
  %v2162 = vpop.permute.xlu0 %2161
  %v2163 = vsel %vm38, %v2162, 0
  %2165 = vmatprep.subr.mxu0 0.0
  %2166 = vmatpush1.msra.mxu0 %v1446
  %2167 = vmatprep.subr.mxu0 0.0
  %2168 = vmatpush1.msra.mxu0 %v1447
  %2169 = vmatprep.subr.mxu0 0.0
  %2170 = vmatpush1.msra.mxu0 %v1448
  %2171 = vmatprep.subr.mxu0 0.0
  %2172 = vmatpush1.msra.mxu0 %v1449
  %2173 = vmatprep.subr.mxu0 0.0
  %2174 = vmatpush1.msra.mxu0 0.0
  %2175 = vmatprep.subr.mxu0 0.0
  %2176 = vmatpush1.msra.mxu0 0.0
  %2177 = vmatprep.subr.mxu0 0.0
  %2178 = vmatpush1.msra.mxu0 0.0
  %2179 = vmatprep.subr.mxu0 0.0
  %2180 = vmatpush1.msra.mxu0 0.0
  %2181 = vmatprep.subr.mxu0 0.0
  %2182 = vmatpush1.msra.mxu0 0.0
  %2183 = vmatprep.subr.mxu0 0.0
  %2184 = vmatpush1.msra.mxu0 0.0
  %2185 = vmatprep.subr.mxu0 0.0
  %2186 = vmatpush1.msra.mxu0 0.0
  %2187 = vmatprep.subr.mxu0 0.0
  %2188 = vmatpush1.msra.mxu0 0.0
  %2189 = vmatprep.subr.mxu0 0.0
  %2190 = vmatpush1.msra.mxu0 0.0
  %2191 = vmatprep.subr.mxu0 0.0
  %2192 = vmatpush1.msra.mxu0 0.0
  %2193 = vmatprep.subr.mxu0 0.0
  %2194 = vmatpush1.msra.mxu0 0.0
  %2195 = vmatprep.subr.mxu0 0.0
  %2196 = vmatpush1.msra.mxu0 0.0
  %2197 = vmatprep.subr.mxu0 0.0
  %2198 = vmatpush1.msra.mxu0 0.0
  %2199 = vmatprep.subr.mxu0 0.0
  %2200 = vmatpush1.msra.mxu0 0.0
  %2201 = vmatprep.subr.mxu0 0.0
  %2202 = vmatpush1.msra.mxu0 0.0
  %2203 = vmatprep.subr.mxu0 0.0
  %2204 = vmatpush1.msra.mxu0 0.0
  %2205 = vmatprep.subr.mxu0 0.0
  %2206 = vmatpush1.msra.mxu0 0.0
  %2207 = vmatprep.subr.mxu0 0.0
  %2208 = vmatpush1.msra.mxu0 0.0
  %2209 = vmatprep.subr.mxu0 0.0
  %2210 = vmatpush1.msra.mxu0 0.0
  %2211 = vmatprep.subr.mxu0 0.0
  %2212 = vmatpush1.msra.mxu0 0.0
  %2213 = vmatprep.subr.mxu0 0.0
  %2214 = vmatpush1.msra.mxu0 0.0
  %2215 = vmatprep.subr.mxu0 0.0
  %2216 = vmatpush1.msra.mxu0 0.0
  %2217 = vmatprep.subr.mxu0 0.0
  %2218 = vmatpush1.msra.mxu0 0.0
  %2219 = vmatprep.subr.mxu0 0.0
  %2220 = vmatpush1.msra.mxu0 0.0
  %2221 = vmatprep.subr.mxu0 0.0
  %2222 = vmatpush1.msra.mxu0 0.0
  %2223 = vmatprep.subr.mxu0 0.0
  %2224 = vmatpush1.msra.mxu0 0.0
  %2225 = vmatprep.subr.mxu0 0.0
  %2226 = vmatpush1.msra.mxu0 0.0
  %2227 = vmatprep.subr.mxu0 0.0
  %2228 = vmatpush1.msra.mxu0 0.0
  %2229 = vmatprep.mubr.f32.mxu0 0.0
  %2230 = vmatmul.mubr.f32.gmra.mrb[0].mxu0 %v2163
  %v2231 = vpop.f32.mrb[0].mxu0
  %v2232 = vadd.f32 0.0, %v2231
  %v2233 = vpop.f32.mrb[0].mxu0
  %2234 = vdwg.mxu0
  %v2235 = vadd.f32 %v2159, %v2232
  %v2236 = vtanh.pop %v2235
  %v2237 = vxor.u32 %v2235, 2147483648
  %v2238 = vmul.f32 %v2237, 1.442695
  %v2239 = vpow.pop %v2238
  %v2240 = vadd.f32 %v2239, 1.0
  %v2241 = vrcp.pop %v2240
  %v2242 = vmul.f32 1.0, %v2241
  %v2243 = vsel %vm27, %v2236, %v2242
  %v2244 = vmul.f32 %v2243, %v2152
  %2246 = vrot.lane.b32.xlu0 %v2243, 64
  %v2247 = vpop.permute.xlu0 %2246
  %v2249 = vmul.f32 %v2243, %v2247
  %2251 = vrot.lane.b32.xlu0 %v2249, 32
  %v2252 = vpop.permute.xlu0 %2251
  %v2254 = vadd.f32 %v2244, %v2252
  %v2255 = vtanh.pop %v2254
  %2257 = vrot.lane.b32.xlu0 %v2255, 64
  %v2258 = vpop.permute.xlu0 %2257
  %v2260 = vmul.f32 %v2243, %v2258
  %v2261 = vld [vmem:[%s4] sm:$0xff]
  %v2262 = vld [vmem:[%s4 + $0x8] sm:$0xff]
  %v2263 = vld [vmem:[%s4 + $0x10] sm:$0xff]
  %v2264 = vld [vmem:[%s4 + $0x18] sm:$0xff]
  %v2265 = vld [vmem:[%s5] sm:$0x1]
  %v2267 = vlaneseq
  %v2268 = vshrl.u32 %v2267, 7
  %v2269 = vsub.s32 0, %v2268
  %v2270 = vrot.slane %v2265, %v2269
  %2273 = vrot.lane.b32.xlu0 %v2260, 32
  %v2274 = vpop.permute.xlu0 %2273
  %v2275 = vsel %vm38, %v2274, 0
  %2277 = vmatprep.subr.mxu0 0.0
  %2278 = vmatpush1.msra.mxu0 %v2261
  %2279 = vmatprep.subr.mxu0 0.0
  %2280 = vmatpush1.msra.mxu0 %v2262
  %2281 = vmatprep.subr.mxu0 0.0
  %2282 = vmatpush1.msra.mxu0 %v2263
  %2283 = vmatprep.subr.mxu0 0.0
  %2284 = vmatpush1.msra.mxu0 %v2264
  %2285 = vmatprep.subr.mxu0 0.0
  %2286 = vmatpush1.msra.mxu0 0.0
  %2287 = vmatprep.subr.mxu0 0.0
  %2288 = vmatpush1.msra.mxu0 0.0
  %2289 = vmatprep.subr.mxu0 0.0
  %2290 = vmatpush1.msra.mxu0 0.0
  %2291 = vmatprep.subr.mxu0 0.0
  %2292 = vmatpush1.msra.mxu0 0.0
  %2293 = vmatprep.subr.mxu0 0.0
  %2294 = vmatpush1.msra.mxu0 0.0
  %2295 = vmatprep.subr.mxu0 0.0
  %2296 = vmatpush1.msra.mxu0 0.0
  %2297 = vmatprep.subr.mxu0 0.0
  %2298 = vmatpush1.msra.mxu0 0.0
  %2299 = vmatprep.subr.mxu0 0.0
  %2300 = vmatpush1.msra.mxu0 0.0
  %2301 = vmatprep.subr.mxu0 0.0
  %2302 = vmatpush1.msra.mxu0 0.0
  %2303 = vmatprep.subr.mxu0 0.0
  %2304 = vmatpush1.msra.mxu0 0.0
  %2305 = vmatprep.subr.mxu0 0.0
  %2306 = vmatpush1.msra.mxu0 0.0
  %2307 = vmatprep.subr.mxu0 0.0
  %2308 = vmatpush1.msra.mxu0 0.0
  %2309 = vmatprep.subr.mxu0 0.0
  %2310 = vmatpush1.msra.mxu0 0.0
  %2311 = vmatprep.subr.mxu0 0.0
  %2312 = vmatpush1.msra.mxu0 0.0
  %2313 = vmatprep.subr.mxu0 0.0
  %2314 = vmatpush1.msra.mxu0 0.0
  %2315 = vmatprep.subr.mxu0 0.0
  %2316 = vmatpush1.msra.mxu0 0.0
  %2317 = vmatprep.subr.mxu0 0.0
  %2318 = vmatpush1.msra.mxu0 0.0
  %2319 = vmatprep.subr.mxu0 0.0
  %2320 = vmatpush1.msra.mxu0 0.0
  %2321 = vmatprep.subr.mxu0 0.0
  %2322 = vmatpush1.msra.mxu0 0.0
  %2323 = vmatprep.subr.mxu0 0.0
  %2324 = vmatpush1.msra.mxu0 0.0
  %2325 = vmatprep.subr.mxu0 0.0
  %2326 = vmatpush1.msra.mxu0 0.0
  %2327 = vmatprep.subr.mxu0 0.0
  %2328 = vmatpush1.msra.mxu0 0.0
  %2329 = vmatprep.subr.mxu0 0.0
  %2330 = vmatpush1.msra.mxu0 0.0
  %2331 = vmatprep.subr.mxu0 0.0
  %2332 = vmatpush1.msra.mxu0 0.0
  %2333 = vmatprep.subr.mxu0 0.0
  %2334 = vmatpush1.msra.mxu0 0.0
  %2335 = vmatprep.subr.mxu0 0.0
  %2336 = vmatpush1.msra.mxu0 0.0
  %2337 = vmatprep.subr.mxu0 0.0
  %2338 = vmatpush1.msra.mxu0 0.0
  %2339 = vmatprep.subr.mxu0 0.0
  %2340 = vmatpush1.msra.mxu0 0.0
  %2341 = vmatprep.mubr.f32.mxu0 0.0
  %2342 = vmatmul.mubr.f32.gmra.mrb[0].mxu0 %v2275
  %v2343 = vpop.f32.mrb[0].mxu0
  %v2344 = vadd.f32 %v2270, %v2343
  %v2345 = vpop.f32.mrb[0].mxu0
  %2346 = vdwg.mxu0
  %2347 = vst [vmem:[%s6] sm:$0xff] %v2344
  // Predicated region
  $region26: #{lstm_model_forward.1} parent=0 // pred_check
    _
  $region27: #{lstm_model_forward.1} parent=0 // pred_check_branch
    %2349 = sbr.rel (0) target = $region29
  $region28: #{lstm_model_forward.1} parent=0 // pred_region
    _
  $region29: #{lstm_model_forward.1} parent=0 // pred_fallthru
    _
  // Predicated region
  $region30: #{lstm_model_forward.1} parent=0 // pred_check
    _
  $region31: #{lstm_model_forward.1} parent=0 // pred_check_branch
    %2351 = sbr.rel (0) target = $region33
  $region32: #{lstm_model_forward.1} parent=0 // pred_region
    _
  $region33: #{lstm_model_forward.1} parent=0 // pred_fallthru
    _

</llo_original>
